<compile_context>
chip_gen: v5e
topology: v5e:2x2
jax: 0.10.0
libtpu: 0.0.40
codegen_flags: <defaults>
</compile_context>

<pallas_src>
import functools

import jax
import jax.numpy as jnp
from jax.experimental import pallas as pl
from jax.experimental.pallas import tpu as pltpu


# ----------------------------------------------------------------------------- helpers
def _bigru_attn_pool(gi_scr, hf_scr, hb_scr,
                     whh_f, bhh_f, whh_b, bhh_b,
                     lin_w, lin_b, ctx_w, H):
    """BiGRU over time + tanh-linear attention pooling.

    gi_scr : VMEM ref (T, N, 6H) -- precomputed input projections, [fwd r,z,n | bwd r,z,n]
    hf_scr / hb_scr : VMEM refs (T, N, H) -- per-direction hidden-state history
    Returns pooled features (N, 2H) in f32.
    """
    T, N, _ = gi_scr.shape
    h0 = jnp.zeros((N, H), jnp.float32)

    # One fused loop: forward direction at time i, backward direction at time T-1-i.
    # The two small matmuls per iteration are independent -> they overlap on the MXU,
    # so the serial recurrence is T steps instead of 2T.
    def step(i, carry):
        h_f, h_b = carry
        tb = T - 1 - i
        gi_f = gi_scr[i]                                                      # (N, 6H)
        gi_b = gi_scr[tb]                                                     # (N, 6H)
        gh_f = jnp.dot(h_f, whh_f, preferred_element_type=jnp.float32) + bhh_f
        gh_b = jnp.dot(h_b, whh_b, preferred_element_type=jnp.float32) + bhh_b

        r_f = jax.nn.sigmoid(gi_f[:, 0:H] + gh_f[:, 0:H])
        z_f = jax.nn.sigmoid(gi_f[:, H:2 * H] + gh_f[:, H:2 * H])
        n_f = jnp.tanh(gi_f[:, 2 * H:3 * H] + r_f * gh_f[:, 2 * H:3 * H])
        h_f = (1.0 - z_f) * n_f + z_f * h_f

        r_b = jax.nn.sigmoid(gi_b[:, 3 * H:4 * H] + gh_b[:, 0:H])
        z_b = jax.nn.sigmoid(gi_b[:, 4 * H:5 * H] + gh_b[:, H:2 * H])
        n_b = jnp.tanh(gi_b[:, 5 * H:6 * H] + r_b * gh_b[:, 2 * H:3 * H])
        h_b = (1.0 - z_b) * n_b + z_b * h_b

        hf_scr[i] = h_f
        hb_scr[tb] = h_b
        return (h_f, h_b)

    jax.lax.fori_loop(0, T, step, (h0, h0))

    # ---- batched attention over the T timesteps -----------------------------------
    h2 = jnp.concatenate([hf_scr[...], hb_scr[...]], axis=-1)                # (T, N, 2H)
    u = jnp.tanh(jnp.dot(h2.reshape(T * N, 2 * H), lin_w,
                         preferred_element_type=jnp.float32) + lin_b)        # (T*N, 2H)
    scores = jnp.sum(u * ctx_w, axis=-1, keepdims=True).reshape(T, N, 1)     # (T, N, 1)

    m = jnp.max(scores, axis=0, keepdims=True)                               # (1, N, 1)
    e = jnp.exp(scores - m)
    denom = jnp.sum(e, axis=0, keepdims=True)
    alpha = e * pl.reciprocal(denom, approx=True)                            # (T, N, 1)
    return jnp.sum(alpha * h2, axis=0)                                       # (N, 2H)


# ----------------------------------------------------------------------------- kernels
def word_att_kernel(H, emb_ref, w_ih, b_ih, whh_f, bhh_f, whh_b, bhh_b,
                    lin_w, lin_b, ctx_w, out_ref, gi_scr, hf_scr, hb_scr):
    # emb_ref: (W, N, E) with N = TS * B_pad (TS sentences folded into the batch).
    T, N, E = emb_ref.shape
    x_flat = emb_ref[...].reshape(T * N, E)
    gi = jnp.dot(x_flat, w_ih[...], preferred_element_type=jnp.float32) + b_ih[...]
    gi_scr[...] = gi.reshape(T, N, gi.shape[-1])
    pooled = _bigru_attn_pool(gi_scr, hf_scr, hb_scr,
                              whh_f[...], bhh_f[...], whh_b[...], bhh_b[...],
                              lin_w[...], lin_b[...], ctx_w[...], H)
    out_ref[...] = pooled                                                    # (N, 2H)


def sent_att_kernel(H, x_ref, w_ih, b_ih, whh_f, bhh_f, whh_b, bhh_b,
                    lin_w, lin_b, ctx_w, fc_w, fc_b,
                    o_ref, fea_ref, gi_scr, hf_scr, hb_scr):
    # x_ref: (S, TB, 2*Hw) sentence vectors for one batch tile.
    T, N, D = x_ref.shape
    x_flat = x_ref[...].reshape(T * N, D)
    gi = jnp.dot(x_flat, w_ih[...], preferred_element_type=jnp.float32) + b_ih[...]
    gi_scr[...] = gi.reshape(T, N, gi.shape[-1])
    pooled = _bigru_attn_pool(gi_scr, hf_scr, hb_scr,
                              whh_f[...], bhh_f[...], whh_b[...], bhh_b[...],
                              lin_w[...], lin_b[...], ctx_w[...], H)
    fea_ref[...] = pooled
    o_ref[...] = jnp.dot(pooled, fc_w[...], preferred_element_type=jnp.float32) + fc_b[...]


# ----------------------------------------------------------------------------- wrapper
def _const_spec(shape):
    n = len(shape)
    return pl.BlockSpec(shape, lambda i, _n=n: (0,) * _n)


def _pick_sentence_tile(S, B_pad, W, E, m_target=256, vmem_budget=4 << 20):
    """Largest divisor TS of S s.t. the (W, TS*B_pad, E) block stays small and the grid
    keeps >=2 steps (megacore / pipelining) whenever possible."""
    best = 1
    for ts in range(1, S + 1):
        if S % ts:
            continue
        if ts * B_pad > m_target:
            continue
        if ts * B_pad * W * E * 4 > vmem_budget:
            continue
        if ts != 1 and S >= 2 and S // ts < 2:
            continue
        best = ts
    return best


def hier_att_net(x, params):
    """x: (B, S, W) int32 token ids.  Returns (logits (B, C), doc features (B, 2*Hs))."""
    B, S, W = x.shape
    E = params["embed"].shape[1]
    Hw = params["w_whh_f"].shape[0]
    Hs = params["s_whh_f"].shape[0]
    C = params["fc_w"].shape[1]

    # Pad batch to a sublane multiple; padded rows are independent and sliced off at the end.
    B_pad = ((B + 7) // 8) * 8
    if B_pad != B:
        x = jnp.pad(x, ((0, B_pad - B), (0, 0), (0, 0)))

    # Gather directly in seq-major layout (transpose the tiny id tensor, not the embeddings).
    ids = jnp.transpose(x, (2, 1, 0)).reshape(W, S * B_pad)       # rows ordered (s, b)
    emb = params["embed"][ids]                                    # (W, S*B_pad, E)

    # Concatenate the two directions' input-projection weights once (tiny, one-time).
    w_ih_w = jnp.concatenate([params["w_wih_f"], params["w_wih_b"]], axis=1)   # (E, 6Hw)
    b_ih_w = jnp.concatenate([params["w_bih_f"], params["w_bih_b"]], axis=1)   # (1, 6Hw)
    w_ih_s = jnp.concatenate([params["s_wih_f"], params["s_wih_b"]], axis=1)   # (2Hw, 6Hs)
    b_ih_s = jnp.concatenate([params["s_bih_f"], params["s_bih_b"]], axis=1)   # (1, 6Hs)

    # ---- word-level attention net: TS sentences per grid step -------------------------
    TS = _pick_sentence_tile(S, B_pad, W, E)
    NBw = TS * B_pad
    word_in = [emb, w_ih_w, b_ih_w,
               params["w_whh_f"], params["w_bhh_f"],
               params["w_whh_b"], params["w_bhh_b"],
               params["w_lin_w"], params["w_lin_b"], params["w_ctx"]]
    word_specs = [pl.BlockSpec((W, NBw, E), lambda i: (0, i, 0))] + \
                 [_const_spec(a.shape) for a in word_in[1:]]
    word_attn = pl.pallas_call(
        functools.partial(word_att_kernel, Hw),
        out_shape=jax.ShapeDtypeStruct((S * B_pad, 2 * Hw), jnp.float32),
        grid=(S // TS,),
        in_specs=word_specs,
        out_specs=pl.BlockSpec((NBw, 2 * Hw), lambda i: (i, 0)),
        scratch_shapes=[pltpu.VMEM((W, NBw, 6 * Hw), jnp.float32),
                        pltpu.VMEM((W, NBw, Hw), jnp.float32),
                        pltpu.VMEM((W, NBw, Hw), jnp.float32)],
        compiler_params=pltpu.CompilerParams(dimension_semantics=("parallel",)),
    )(*word_in)

    # ---- sentence-level attention net + classifier (parallel over batch tiles) --------
    sent_x = word_attn.reshape(S, B_pad, 2 * Hw)                  # free reshape in XLA
    TB = B_pad // 2 if (B_pad % 16 == 0) else B_pad               # >=2 tiles when possible
    sent_in = [sent_x, w_ih_s, b_ih_s,
               params["s_whh_f"], params["s_bhh_f"],
               params["s_whh_b"], params["s_bhh_b"],
               params["s_lin_w"], params["s_lin_b"], params["s_ctx"],
               params["fc_w"], params["fc_b"]]
    sent_specs = [pl.BlockSpec((S, TB, 2 * Hw), lambda j: (0, j, 0))] + \
                 [_const_spec(a.shape) for a in sent_in[1:]]
    o, fea = pl.pallas_call(
        functools.partial(sent_att_kernel, Hs),
        out_shape=(jax.ShapeDtypeStruct((B_pad, C), jnp.float32),
                   jax.ShapeDtypeStruct((B_pad, 2 * Hs), jnp.float32)),
        grid=(B_pad // TB,),
        in_specs=sent_specs,
        out_specs=(pl.BlockSpec((TB, C), lambda j: (j, 0)),
                   pl.BlockSpec((TB, 2 * Hs), lambda j: (j, 0))),
        scratch_shapes=[pltpu.VMEM((S, TB, 6 * Hs), jnp.float32),
                        pltpu.VMEM((S, TB, Hs), jnp.float32),
                        pltpu.VMEM((S, TB, Hs), jnp.float32)],
        compiler_params=pltpu.CompilerParams(dimension_semantics=("parallel",)),
    )(*sent_in)
    return o[:B], fea[:B]


# ----------------------------------------------------------------------------- params
def init_params(key, V, E, Hw, Hs, C):
    shapes = {
        "embed":   (V, E),
        # word-level bidirectional GRU (input E, hidden Hw), fwd/bwd; gate order r,z,n
        "w_wih_f": (E, 3 * Hw), "w_whh_f": (Hw, 3 * Hw),
        "w_bih_f": (1, 3 * Hw), "w_bhh_f": (1, 3 * Hw),
        "w_wih_b": (E, 3 * Hw), "w_whh_b": (Hw, 3 * Hw),
        "w_bih_b": (1, 3 * Hw), "w_bhh_b": (1, 3 * Hw),
        "w_lin_w": (2 * Hw, 2 * Hw), "w_lin_b": (1, 2 * Hw), "w_ctx": (1, 2 * Hw),
        # sentence-level bidirectional GRU (input 2*Hw, hidden Hs), fwd/bwd
        "s_wih_f": (2 * Hw, 3 * Hs), "s_whh_f": (Hs, 3 * Hs),
        "s_bih_f": (1, 3 * Hs), "s_bhh_f": (1, 3 * Hs),
        "s_wih_b": (2 * Hw, 3 * Hs), "s_whh_b": (Hs, 3 * Hs),
        "s_bih_b": (1, 3 * Hs), "s_bhh_b": (1, 3 * Hs),
        "s_lin_w": (2 * Hs, 2 * Hs), "s_lin_b": (1, 2 * Hs), "s_ctx": (1, 2 * Hs),
        # classifier
        "fc_w": (2 * Hs, C), "fc_b": (1, C),
    }
    keys = jax.random.split(key, len(shapes))
    return {name: jax.random.uniform(k, shp, jnp.float32, -0.1, 0.1)
            for (name, shp), k in zip(shapes.items(), keys)}


if __name__ == "__main__":
    # Small synthetic configuration (module defaults are words_dim=300, hidden=50,
    # num_classes=10; reduced sizes with identical structure).
    B, S, W = 2, 4, 8          # batch, sentences per doc, words per sentence
    V, E = 50, 32              # vocab size, words_dim
    Hw, Hs, C = 16, 16, 10     # word hidden, sentence hidden, num_classes

    key = jax.random.PRNGKey(0)
    kx, kp = jax.random.split(key)
    x = jax.random.randint(kx, (B, S, W), 0, V, dtype=jnp.int32)
    params = init_params(kp, V, E, Hw, Hs, C)

    o, fea = jax.jit(hier_att_net)(x, params)
    jax.block_until_ready((o, fea))
    assert o.shape == (B, C) and fea.shape == (B, 2 * Hs)
    assert o.dtype == jnp.float32 and fea.dtype == jnp.float32
    print("KERNEL_OK")
</pallas_src>

<mosaic_0001>
module attributes {stable_mosaic.version = 11 : i64} {
  func.func @word_att_kernel(%arg0: i32, %arg1: memref<8x16x32xf32, #tpu.memory_space<vmem>>, %arg2: memref<32x96xf32, #tpu.memory_space<vmem>>, %arg3: memref<1x96xf32, #tpu.memory_space<vmem>>, %arg4: memref<16x48xf32, #tpu.memory_space<vmem>>, %arg5: memref<1x48xf32, #tpu.memory_space<vmem>>, %arg6: memref<16x48xf32, #tpu.memory_space<vmem>>, %arg7: memref<1x48xf32, #tpu.memory_space<vmem>>, %arg8: memref<32x32xf32, #tpu.memory_space<vmem>>, %arg9: memref<1x32xf32, #tpu.memory_space<vmem>>, %arg10: memref<1x32xf32, #tpu.memory_space<vmem>>, %arg11: memref<16x32xf32, #tpu.memory_space<vmem>>, %arg12: memref<8x16x96xf32, #tpu.memory_space<vmem>>, %arg13: memref<8x16x16xf32, #tpu.memory_space<vmem>>, %arg14: memref<8x16x16xf32, #tpu.memory_space<vmem>>) attributes {dimension_semantics = [#tpu.dimension_semantics<parallel>], iteration_bounds = array<i64: 2>, scalar_prefetch = 0 : i64, scratch_operands = 3 : i64, tpu.core_type = #tpu.core_type<tc>, window_params = [{transform_indices = @transform_0, window_bounds = array<i64: 8, 16, 32>}, {pipeline_mode = #tpu.pipeline_mode<synchronous>, transform_indices = @transform_1, window_bounds = array<i64: 32, 96>}, {pipeline_mode = #tpu.pipeline_mode<synchronous>, transform_indices = @transform_2, window_bounds = array<i64: 1, 96>}, {pipeline_mode = #tpu.pipeline_mode<synchronous>, transform_indices = @transform_3, window_bounds = array<i64: 16, 48>}, {pipeline_mode = #tpu.pipeline_mode<synchronous>, transform_indices = @transform_4, window_bounds = array<i64: 1, 48>}, {pipeline_mode = #tpu.pipeline_mode<synchronous>, transform_indices = @transform_5, window_bounds = array<i64: 16, 48>}, {pipeline_mode = #tpu.pipeline_mode<synchronous>, transform_indices = @transform_6, window_bounds = array<i64: 1, 48>}, {pipeline_mode = #tpu.pipeline_mode<synchronous>, transform_indices = @transform_7, window_bounds = array<i64: 32, 32>}, {pipeline_mode = #tpu.pipeline_mode<synchronous>, transform_indices = @transform_8, window_bounds = array<i64: 1, 32>}, {pipeline_mode = #tpu.pipeline_mode<synchronous>, transform_indices = @transform_9, window_bounds = array<i64: 1, 32>}, {transform_indices = @transform_10, window_bounds = array<i64: 16, 32>}]} {
    %c0 = arith.constant 0 : index
    %c0_0 = arith.constant 0 : index
    %c0_1 = arith.constant 0 : index
    %0 = vector.load %arg1[%c0, %c0_0, %c0_1] : memref<8x16x32xf32, #tpu.memory_space<vmem>>, vector<8x16x32xf32>
    %1 = vector.shape_cast %0 : vector<8x16x32xf32> to vector<128x32xf32>
    %c0_2 = arith.constant 0 : index
    %c0_3 = arith.constant 0 : index
    %2 = vector.load %arg2[%c0_2, %c0_3] : memref<32x96xf32, #tpu.memory_space<vmem>>, vector<32x96xf32>
    %cst = arith.constant dense<0.000000e+00> : vector<128x96xf32>
    %3 = tpu.matmul %1, %2, %cst {dimension_numbers = #tpu.dot_dimension_numbers<[1], [0], [0], [1], [0, 0, 1, 1], [], []>} : vector<128x32xf32>, vector<32x96xf32>, vector<128x96xf32> -> vector<128x96xf32>
    %c0_4 = arith.constant 0 : index
    %c0_5 = arith.constant 0 : index
    %4 = vector.load %arg3[%c0_4, %c0_5] : memref<1x96xf32, #tpu.memory_space<vmem>>, vector<1x96xf32>
    %5 = vector.broadcast %4 : vector<1x96xf32> to vector<128x96xf32>
    %6 = arith.addf %3, %5 : vector<128x96xf32>
    %7 = vector.shape_cast %6 : vector<128x96xf32> to vector<8x16x96xf32>
    %c0_6 = arith.constant 0 : index
    %c0_7 = arith.constant 0 : index
    %c0_8 = arith.constant 0 : index
    %8 = vector.load %arg12[%c0_6, %c0_7, %c0_8] : memref<8x16x96xf32, #tpu.memory_space<vmem>>, vector<8x16x96xf32>
    tpu.vector_store %arg12[%c0_6, %c0_7, %c0_8], %7 {strides = array<i32>} : memref<8x16x96xf32, #tpu.memory_space<vmem>>, vector<8x16x96xf32>,
    %c0_9 = arith.constant 0 : index
    %c0_10 = arith.constant 0 : index
    %9 = vector.load %arg4[%c0_9, %c0_10] : memref<16x48xf32, #tpu.memory_space<vmem>>, vector<16x48xf32>
    %c0_11 = arith.constant 0 : index
    %c0_12 = arith.constant 0 : index
    %10 = vector.load %arg5[%c0_11, %c0_12] : memref<1x48xf32, #tpu.memory_space<vmem>>, vector<1x48xf32>
    %c0_13 = arith.constant 0 : index
    %c0_14 = arith.constant 0 : index
    %11 = vector.load %arg6[%c0_13, %c0_14] : memref<16x48xf32, #tpu.memory_space<vmem>>, vector<16x48xf32>
    %c0_15 = arith.constant 0 : index
    %c0_16 = arith.constant 0 : index
    %12 = vector.load %arg7[%c0_15, %c0_16] : memref<1x48xf32, #tpu.memory_space<vmem>>, vector<1x48xf32>
    %c0_17 = arith.constant 0 : index
    %c0_18 = arith.constant 0 : index
    %13 = vector.load %arg8[%c0_17, %c0_18] : memref<32x32xf32, #tpu.memory_space<vmem>>, vector<32x32xf32>
    %c0_19 = arith.constant 0 : index
    %c0_20 = arith.constant 0 : index
    %14 = vector.load %arg9[%c0_19, %c0_20] : memref<1x32xf32, #tpu.memory_space<vmem>>, vector<1x32xf32>
    %c0_21 = arith.constant 0 : index
    %c0_22 = arith.constant 0 : index
    %15 = vector.load %arg10[%c0_21, %c0_22] : memref<1x32xf32, #tpu.memory_space<vmem>>, vector<1x32xf32>
    %cst_23 = arith.constant 0.000000e+00 : f32
    %16 = vector.broadcast %cst_23 : f32 to vector<16x16xf32>
    %c0_i32 = arith.constant 0 : i32
    %c8_i32 = arith.constant 8 : i32
    %17 = arith.addi %c0_i32, %c8_i32 : i32
    %c1_i32 = arith.constant 1 : i32
    %18:2 = scf.for %arg15 = %c0_i32 to %17 step %c1_i32 iter_args(%arg16 = %16, %arg17 = %16) -> (vector<16x16xf32>, vector<16x16xf32>)  : i32 {
      %c7_i32 = arith.constant 7 : i32
      %46 = arith.subi %c7_i32, %arg15 : i32
      %47 = arith.index_cast %arg15 : i32 to index
      %c0_38 = arith.constant 0 : index
      %c0_39 = arith.constant 0 : index
      %48 = vector.load %arg12[%47, %c0_38, %c0_39] : memref<8x16x96xf32, #tpu.memory_space<vmem>>, vector<1x16x96xf32>
      %49 = vector.shape_cast %48 : vector<1x16x96xf32> to vector<16x96xf32>
      %50 = arith.index_cast %46 : i32 to index
      %c0_40 = arith.constant 0 : index
      %c0_41 = arith.constant 0 : index
      %51 = vector.load %arg12[%50, %c0_40, %c0_41] : memref<8x16x96xf32, #tpu.memory_space<vmem>>, vector<1x16x96xf32>
      %52 = vector.shape_cast %51 : vector<1x16x96xf32> to vector<16x96xf32>
      %cst_42 = arith.constant dense<0.000000e+00> : vector<16x48xf32>
      %53 = tpu.matmul %arg16, %9, %cst_42 {dimension_numbers = #tpu.dot_dimension_numbers<[1], [0], [0], [1], [0, 0, 1, 1], [], []>} : vector<16x16xf32>, vector<16x48xf32>, vector<16x48xf32> -> vector<16x48xf32>
      %54 = vector.broadcast %10 : vector<1x48xf32> to vector<16x48xf32>
      %55 = arith.addf %53, %54 : vector<16x48xf32>
      %cst_43 = arith.constant dense<0.000000e+00> : vector<16x48xf32>
      %56 = tpu.matmul %arg17, %11, %cst_43 {dimension_numbers = #tpu.dot_dimension_numbers<[1], [0], [0], [1], [0, 0, 1, 1], [], []>} : vector<16x16xf32>, vector<16x48xf32>, vector<16x48xf32> -> vector<16x48xf32>
      %57 = vector.broadcast %12 : vector<1x48xf32> to vector<16x48xf32>
      %58 = arith.addf %56, %57 : vector<16x48xf32>
      %59 = vector.extract_strided_slice %49 {offsets = [0, 0], sizes = [16, 16], strides = [1, 1]} : vector<16x96xf32> to vector<16x16xf32>
      %60 = vector.extract_strided_slice %55 {offsets = [0, 0], sizes = [16, 16], strides = [1, 1]} : vector<16x48xf32> to vector<16x16xf32>
      %61 = arith.addf %59, %60 : vector<16x16xf32>
      %62 = arith.negf %61 : vector<16x16xf32>
      %63 = math.exp %62 : vector<16x16xf32>
      %cst_44 = arith.constant 1.000000e+00 : f32
      %64 = vector.broadcast %cst_44 : f32 to vector<16x16xf32>
      %65 = arith.addf %64, %63 : vector<16x16xf32>
      %66 = arith.divf %64, %65 : vector<16x16xf32>
      %67 = vector.extract_strided_slice %49 {offsets = [0, 16], sizes = [16, 16], strides = [1, 1]} : vector<16x96xf32> to vector<16x16xf32>
      %68 = vector.extract_strided_slice %55 {offsets = [0, 16], sizes = [16, 16], strides = [1, 1]} : vector<16x48xf32> to vector<16x16xf32>
      %69 = arith.addf %67, %68 : vector<16x16xf32>
      %70 = arith.negf %69 : vector<16x16xf32>
      %71 = math.exp %70 : vector<16x16xf32>
      %cst_45 = arith.constant 1.000000e+00 : f32
      %72 = vector.broadcast %cst_45 : f32 to vector<16x16xf32>
      %73 = arith.addf %72, %71 : vector<16x16xf32>
      %74 = arith.divf %72, %73 : vector<16x16xf32>
      %75 = vector.extract_strided_slice %49 {offsets = [0, 32], sizes = [16, 16], strides = [1, 1]} : vector<16x96xf32> to vector<16x16xf32>
      %76 = vector.extract_strided_slice %55 {offsets = [0, 32], sizes = [16, 16], strides = [1, 1]} : vector<16x48xf32> to vector<16x16xf32>
      %77 = arith.mulf %66, %76 : vector<16x16xf32>
      %78 = arith.addf %75, %77 : vector<16x16xf32>
      %79 = math.tanh %78 : vector<16x16xf32>
      %cst_46 = arith.constant 1.000000e+00 : f32
      %80 = vector.broadcast %cst_46 : f32 to vector<16x16xf32>
      %81 = arith.subf %80, %74 : vector<16x16xf32>
      %82 = arith.mulf %81, %79 : vector<16x16xf32>
      %83 = arith.mulf %74, %arg16 : vector<16x16xf32>
      %84 = arith.addf %82, %83 : vector<16x16xf32>
      %85 = vector.extract_strided_slice %52 {offsets = [0, 48], sizes = [16, 16], strides = [1, 1]} : vector<16x96xf32> to vector<16x16xf32>
      %86 = vector.extract_strided_slice %58 {offsets = [0, 0], sizes = [16, 16], strides = [1, 1]} : vector<16x48xf32> to vector<16x16xf32>
      %87 = arith.addf %85, %86 : vector<16x16xf32>
      %88 = arith.negf %87 : vector<16x16xf32>
      %89 = math.exp %88 : vector<16x16xf32>
      %cst_47 = arith.constant 1.000000e+00 : f32
      %90 = vector.broadcast %cst_47 : f32 to vector<16x16xf32>
      %91 = arith.addf %90, %89 : vector<16x16xf32>
      %92 = arith.divf %90, %91 : vector<16x16xf32>
      %93 = vector.extract_strided_slice %52 {offsets = [0, 64], sizes = [16, 16], strides = [1, 1]} : vector<16x96xf32> to vector<16x16xf32>
      %94 = vector.extract_strided_slice %58 {offsets = [0, 16], sizes = [16, 16], strides = [1, 1]} : vector<16x48xf32> to vector<16x16xf32>
      %95 = arith.addf %93, %94 : vector<16x16xf32>
      %96 = arith.negf %95 : vector<16x16xf32>
      %97 = math.exp %96 : vector<16x16xf32>
      %cst_48 = arith.constant 1.000000e+00 : f32
      %98 = vector.broadcast %cst_48 : f32 to vector<16x16xf32>
      %99 = arith.addf %98, %97 : vector<16x16xf32>
      %100 = arith.divf %98, %99 : vector<16x16xf32>
      %101 = vector.extract_strided_slice %52 {offsets = [0, 80], sizes = [16, 16], strides = [1, 1]} : vector<16x96xf32> to vector<16x16xf32>
      %102 = vector.extract_strided_slice %58 {offsets = [0, 32], sizes = [16, 16], strides = [1, 1]} : vector<16x48xf32> to vector<16x16xf32>
      %103 = arith.mulf %92, %102 : vector<16x16xf32>
      %104 = arith.addf %101, %103 : vector<16x16xf32>
      %105 = math.tanh %104 : vector<16x16xf32>
      %cst_49 = arith.constant 1.000000e+00 : f32
      %106 = vector.broadcast %cst_49 : f32 to vector<16x16xf32>
      %107 = arith.subf %106, %100 : vector<16x16xf32>
      %108 = arith.mulf %107, %105 : vector<16x16xf32>
      %109 = arith.mulf %100, %arg17 : vector<16x16xf32>
      %110 = arith.addf %108, %109 : vector<16x16xf32>
      %111 = arith.index_cast %arg15 : i32 to index
      %c0_50 = arith.constant 0 : index
      %c0_51 = arith.constant 0 : index
      %112 = vector.load %arg13[%111, %c0_50, %c0_51] : memref<8x16x16xf32, #tpu.memory_space<vmem>>, vector<1x16x16xf32>
      %113 = vector.shape_cast %112 : vector<1x16x16xf32> to vector<16x16xf32>
      %114 = vector.shape_cast %84 : vector<16x16xf32> to vector<1x16x16xf32>
      tpu.vector_store %arg13[%111, %c0_50, %c0_51], %114 {strides = array<i32>} : memref<8x16x16xf32, #tpu.memory_space<vmem>>, vector<1x16x16xf32>,
      %115 = arith.index_cast %46 : i32 to index
      %c0_52 = arith.constant 0 : index
      %c0_53 = arith.constant 0 : index
      %116 = vector.load %arg14[%115, %c0_52, %c0_53] : memref<8x16x16xf32, #tpu.memory_space<vmem>>, vector<1x16x16xf32>
      %117 = vector.shape_cast %116 : vector<1x16x16xf32> to vector<16x16xf32>
      %118 = vector.shape_cast %110 : vector<16x16xf32> to vector<1x16x16xf32>
      tpu.vector_store %arg14[%115, %c0_52, %c0_53], %118 {strides = array<i32>} : memref<8x16x16xf32, #tpu.memory_space<vmem>>, vector<1x16x16xf32>,
      scf.yield %84, %110 : vector<16x16xf32>, vector<16x16xf32>
    }
    %c8_i32_24 = arith.constant 8 : i32
    %c0_25 = arith.constant 0 : index
    %c0_26 = arith.constant 0 : index
    %c0_27 = arith.constant 0 : index
    %19 = vector.load %arg13[%c0_25, %c0_26, %c0_27] : memref<8x16x16xf32, #tpu.memory_space<vmem>>, vector<8x16x16xf32>
    %c0_28 = arith.constant 0 : index
    %c0_29 = arith.constant 0 : index
    %c0_30 = arith.constant 0 : index
    %20 = vector.load %arg14[%c0_28, %c0_29, %c0_30] : memref<8x16x16xf32, #tpu.memory_space<vmem>>, vector<8x16x16xf32>
    %21 = tpu.concatenate %19, %20 in 2 : vector<8x16x16xf32>, vector<8x16x16xf32> -> vector<8x16x32xf32>
    %22 = vector.shape_cast %21 : vector<8x16x32xf32> to vector<128x32xf32>
    %cst_31 = arith.constant dense<0.000000e+00> : vector<128x32xf32>
    %23 = tpu.matmul %22, %13, %cst_31 {dimension_numbers = #tpu.dot_dimension_numbers<[1], [0], [0], [1], [0, 0, 1, 1], [], []>} : vector<128x32xf32>, vector<32x32xf32>, vector<128x32xf32> -> vector<128x32xf32>
    %24 = vector.broadcast %14 : vector<1x32xf32> to vector<128x32xf32>
    %25 = arith.addf %23, %24 : vector<128x32xf32>
    %26 = math.tanh %25 : vector<128x32xf32>
    %27 = vector.broadcast %15 : vector<1x32xf32> to vector<128x32xf32>
    %28 = arith.mulf %26, %27 : vector<128x32xf32>
    %cst_32 = arith.constant dense<0.000000e+00> : vector<128xf32>
    %29 = vector.multi_reduction <add>, %28, %cst_32 [1] : vector<128x32xf32> to vector<128xf32>
    %30 = vector.shape_cast %29 : vector<128xf32> to vector<128x1xf32>
    %31 = vector.shape_cast %30 : vector<128x1xf32> to vector<8x16x1xf32>
    %cst_33 = arith.constant dense<0xFF800000> : vector<16x1xf32>
    %32 = vector.multi_reduction <maximumf>, %31, %cst_33 [0] : vector<8x16x1xf32> to vector<16x1xf32>
    %33 = vector.shape_cast %32 : vector<16x1xf32> to vector<1x16x1xf32>
    %34 = vector.broadcast %33 : vector<1x16x1xf32> to vector<8x16x1xf32>
    %35 = arith.subf %31, %34 : vector<8x16x1xf32>
    %36 = math.exp %35 : vector<8x16x1xf32>
    %cst_34 = arith.constant dense<0.000000e+00> : vector<16x1xf32>
    %37 = vector.multi_reduction <add>, %36, %cst_34 [0] : vector<8x16x1xf32> to vector<16x1xf32>
    %38 = vector.shape_cast %37 : vector<16x1xf32> to vector<1x16x1xf32>
    %39 = tpu.reciprocal %38 {approx = true} : vector<1x16x1xf32> -> vector<1x16x1xf32>
    %40 = vector.broadcast %39 : vector<1x16x1xf32> to vector<8x16x1xf32>
    %41 = arith.mulf %36, %40 : vector<8x16x1xf32>
    %42 = vector.broadcast %41 : vector<8x16x1xf32> to vector<8x16x32xf32>
    %43 = arith.mulf %42, %21 : vector<8x16x32xf32>
    %cst_35 = arith.constant dense<0.000000e+00> : vector<16x32xf32>
    %44 = vector.multi_reduction <add>, %43, %cst_35 [0] : vector<8x16x32xf32> to vector<16x32xf32>
    %c0_36 = arith.constant 0 : index
    %c0_37 = arith.constant 0 : index
    %45 = vector.load %arg11[%c0_36, %c0_37] : memref<16x32xf32, #tpu.memory_space<vmem>>, vector<16x32xf32>
    tpu.vector_store %arg11[%c0_36, %c0_37], %44 {strides = array<i32>} : memref<16x32xf32, #tpu.memory_space<vmem>>, vector<16x32xf32>,
    return
  }
  func.func @transform_0(%arg0: i32) -> (i32, i32, i32) {
    %c0_i32 = arith.constant 0 : i32
    %c0_i32_0 = arith.constant 0 : i32
    %c0_i32_1 = arith.constant 0 : i32
    return %c0_i32, %arg0, %c0_i32_0 : i32, i32, i32
  }
  func.func @transform_1(%arg0: i32) -> (i32, i32) {
    %c0_i32 = arith.constant 0 : i32
    %c0_i32_0 = arith.constant 0 : i32
    %c0_i32_1 = arith.constant 0 : i32
    return %c0_i32, %c0_i32_0 : i32, i32
  }
  func.func @transform_2(%arg0: i32) -> (i32, i32) {
    %c0_i32 = arith.constant 0 : i32
    %c0_i32_0 = arith.constant 0 : i32
    %c0_i32_1 = arith.constant 0 : i32
    return %c0_i32, %c0_i32_0 : i32, i32
  }
  func.func @transform_3(%arg0: i32) -> (i32, i32) {
    %c0_i32 = arith.constant 0 : i32
    %c0_i32_0 = arith.constant 0 : i32
    %c0_i32_1 = arith.constant 0 : i32
    return %c0_i32, %c0_i32_0 : i32, i32
  }
  func.func @transform_4(%arg0: i32) -> (i32, i32) {
    %c0_i32 = arith.constant 0 : i32
    %c0_i32_0 = arith.constant 0 : i32
    %c0_i32_1 = arith.constant 0 : i32
    return %c0_i32, %c0_i32_0 : i32, i32
  }
  func.func @transform_5(%arg0: i32) -> (i32, i32) {
    %c0_i32 = arith.constant 0 : i32
    %c0_i32_0 = arith.constant 0 : i32
    %c0_i32_1 = arith.constant 0 : i32
    return %c0_i32, %c0_i32_0 : i32, i32
  }
  func.func @transform_6(%arg0: i32) -> (i32, i32) {
    %c0_i32 = arith.constant 0 : i32
    %c0_i32_0 = arith.constant 0 : i32
    %c0_i32_1 = arith.constant 0 : i32
    return %c0_i32, %c0_i32_0 : i32, i32
  }
  func.func @transform_7(%arg0: i32) -> (i32, i32) {
    %c0_i32 = arith.constant 0 : i32
    %c0_i32_0 = arith.constant 0 : i32
    %c0_i32_1 = arith.constant 0 : i32
    return %c0_i32, %c0_i32_0 : i32, i32
  }
  func.func @transform_8(%arg0: i32) -> (i32, i32) {
    %c0_i32 = arith.constant 0 : i32
    %c0_i32_0 = arith.constant 0 : i32
    %c0_i32_1 = arith.constant 0 : i32
    return %c0_i32, %c0_i32_0 : i32, i32
  }
  func.func @transform_9(%arg0: i32) -> (i32, i32) {
    %c0_i32 = arith.constant 0 : i32
    %c0_i32_0 = arith.constant 0 : i32
    %c0_i32_1 = arith.constant 0 : i32
    return %c0_i32, %c0_i32_0 : i32, i32
  }
  func.func @transform_10(%arg0: i32) -> (i32, i32) {
    %c0_i32 = arith.constant 0 : i32
    %c0_i32_0 = arith.constant 0 : i32
    return %arg0, %c0_i32 : i32, i32
  }
}

module attributes {stable_mosaic.version = 11 : i64} {
  func.func @sent_att_kernel(%arg0: i32, %arg1: memref<4x8x32xf32, #tpu.memory_space<vmem>>, %arg2: memref<32x96xf32, #tpu.memory_space<vmem>>, %arg3: memref<1x96xf32, #tpu.memory_space<vmem>>, %arg4: memref<16x48xf32, #tpu.memory_space<vmem>>, %arg5: memref<1x48xf32, #tpu.memory_space<vmem>>, %arg6: memref<16x48xf32, #tpu.memory_space<vmem>>, %arg7: memref<1x48xf32, #tpu.memory_space<vmem>>, %arg8: memref<32x32xf32, #tpu.memory_space<vmem>>, %arg9: memref<1x32xf32, #tpu.memory_space<vmem>>, %arg10: memref<1x32xf32, #tpu.memory_space<vmem>>, %arg11: memref<32x10xf32, #tpu.memory_space<vmem>>, %arg12: memref<1x10xf32, #tpu.memory_space<vmem>>, %arg13: memref<8x10xf32, #tpu.memory_space<vmem>>, %arg14: memref<8x32xf32, #tpu.memory_space<vmem>>, %arg15: memref<4x8x96xf32, #tpu.memory_space<vmem>>, %arg16: memref<4x8x16xf32, #tpu.memory_space<vmem>>, %arg17: memref<4x8x16xf32, #tpu.memory_space<vmem>>) attributes {dimension_semantics = [#tpu.dimension_semantics<parallel>], iteration_bounds = array<i64: 1>, scalar_prefetch = 0 : i64, scratch_operands = 3 : i64, tpu.core_type = #tpu.core_type<tc>, window_params = [{transform_indices = @transform_0, window_bounds = array<i64: 4, 8, 32>}, {pipeline_mode = #tpu.pipeline_mode<synchronous>, transform_indices = @transform_1, window_bounds = array<i64: 32, 96>}, {pipeline_mode = #tpu.pipeline_mode<synchronous>, transform_indices = @transform_2, window_bounds = array<i64: 1, 96>}, {pipeline_mode = #tpu.pipeline_mode<synchronous>, transform_indices = @transform_3, window_bounds = array<i64: 16, 48>}, {pipeline_mode = #tpu.pipeline_mode<synchronous>, transform_indices = @transform_4, window_bounds = array<i64: 1, 48>}, {pipeline_mode = #tpu.pipeline_mode<synchronous>, transform_indices = @transform_5, window_bounds = array<i64: 16, 48>}, {pipeline_mode = #tpu.pipeline_mode<synchronous>, transform_indices = @transform_6, window_bounds = array<i64: 1, 48>}, {pipeline_mode = #tpu.pipeline_mode<synchronous>, transform_indices = @transform_7, window_bounds = array<i64: 32, 32>}, {pipeline_mode = #tpu.pipeline_mode<synchronous>, transform_indices = @transform_8, window_bounds = array<i64: 1, 32>}, {pipeline_mode = #tpu.pipeline_mode<synchronous>, transform_indices = @transform_9, window_bounds = array<i64: 1, 32>}, {pipeline_mode = #tpu.pipeline_mode<synchronous>, transform_indices = @transform_10, window_bounds = array<i64: 32, 10>}, {pipeline_mode = #tpu.pipeline_mode<synchronous>, transform_indices = @transform_11, window_bounds = array<i64: 1, 10>}, {transform_indices = @transform_12, window_bounds = array<i64: 8, 10>}, {transform_indices = @transform_13, window_bounds = array<i64: 8, 32>}]} {
    %c0 = arith.constant 0 : index
    %c0_0 = arith.constant 0 : index
    %c0_1 = arith.constant 0 : index
    %0 = vector.load %arg1[%c0, %c0_0, %c0_1] : memref<4x8x32xf32, #tpu.memory_space<vmem>>, vector<4x8x32xf32>
    %1 = vector.shape_cast %0 : vector<4x8x32xf32> to vector<32x32xf32>
    %c0_2 = arith.constant 0 : index
    %c0_3 = arith.constant 0 : index
    %2 = vector.load %arg2[%c0_2, %c0_3] : memref<32x96xf32, #tpu.memory_space<vmem>>, vector<32x96xf32>
    %cst = arith.constant dense<0.000000e+00> : vector<32x96xf32>
    %3 = tpu.matmul %1, %2, %cst {dimension_numbers = #tpu.dot_dimension_numbers<[1], [0], [0], [1], [0, 0, 1, 1], [], []>} : vector<32x32xf32>, vector<32x96xf32>, vector<32x96xf32> -> vector<32x96xf32>
    %c0_4 = arith.constant 0 : index
    %c0_5 = arith.constant 0 : index
    %4 = vector.load %arg3[%c0_4, %c0_5] : memref<1x96xf32, #tpu.memory_space<vmem>>, vector<1x96xf32>
    %5 = vector.broadcast %4 : vector<1x96xf32> to vector<32x96xf32>
    %6 = arith.addf %3, %5 : vector<32x96xf32>
    %7 = vector.shape_cast %6 : vector<32x96xf32> to vector<4x8x96xf32>
    %c0_6 = arith.constant 0 : index
    %c0_7 = arith.constant 0 : index
    %c0_8 = arith.constant 0 : index
    %8 = vector.load %arg15[%c0_6, %c0_7, %c0_8] : memref<4x8x96xf32, #tpu.memory_space<vmem>>, vector<4x8x96xf32>
    tpu.vector_store %arg15[%c0_6, %c0_7, %c0_8], %7 {strides = array<i32>} : memref<4x8x96xf32, #tpu.memory_space<vmem>>, vector<4x8x96xf32>,
    %c0_9 = arith.constant 0 : index
    %c0_10 = arith.constant 0 : index
    %9 = vector.load %arg4[%c0_9, %c0_10] : memref<16x48xf32, #tpu.memory_space<vmem>>, vector<16x48xf32>
    %c0_11 = arith.constant 0 : index
    %c0_12 = arith.constant 0 : index
    %10 = vector.load %arg5[%c0_11, %c0_12] : memref<1x48xf32, #tpu.memory_space<vmem>>, vector<1x48xf32>
    %c0_13 = arith.constant 0 : index
    %c0_14 = arith.constant 0 : index
    %11 = vector.load %arg6[%c0_13, %c0_14] : memref<16x48xf32, #tpu.memory_space<vmem>>, vector<16x48xf32>
    %c0_15 = arith.constant 0 : index
    %c0_16 = arith.constant 0 : index
    %12 = vector.load %arg7[%c0_15, %c0_16] : memref<1x48xf32, #tpu.memory_space<vmem>>, vector<1x48xf32>
    %c0_17 = arith.constant 0 : index
    %c0_18 = arith.constant 0 : index
    %13 = vector.load %arg8[%c0_17, %c0_18] : memref<32x32xf32, #tpu.memory_space<vmem>>, vector<32x32xf32>
    %c0_19 = arith.constant 0 : index
    %c0_20 = arith.constant 0 : index
    %14 = vector.load %arg9[%c0_19, %c0_20] : memref<1x32xf32, #tpu.memory_space<vmem>>, vector<1x32xf32>
    %c0_21 = arith.constant 0 : index
    %c0_22 = arith.constant 0 : index
    %15 = vector.load %arg10[%c0_21, %c0_22] : memref<1x32xf32, #tpu.memory_space<vmem>>, vector<1x32xf32>
    %cst_23 = arith.constant 0.000000e+00 : f32
    %16 = vector.broadcast %cst_23 : f32 to vector<8x16xf32>
    %c0_i32 = arith.constant 0 : i32
    %c4_i32 = arith.constant 4 : i32
    %17 = arith.addi %c0_i32, %c4_i32 : i32
    %c1_i32 = arith.constant 1 : i32
    %18:2 = scf.for %arg18 = %c0_i32 to %17 step %c1_i32 iter_args(%arg19 = %16, %arg20 = %16) -> (vector<8x16xf32>, vector<8x16xf32>)  : i32 {
      %c3_i32 = arith.constant 3 : i32
      %52 = arith.subi %c3_i32, %arg18 : i32
      %53 = arith.index_cast %arg18 : i32 to index
      %c0_45 = arith.constant 0 : index
      %c0_46 = arith.constant 0 : index
      %54 = vector.load %arg15[%53, %c0_45, %c0_46] : memref<4x8x96xf32, #tpu.memory_space<vmem>>, vector<1x8x96xf32>
      %55 = vector.shape_cast %54 : vector<1x8x96xf32> to vector<8x96xf32>
      %56 = arith.index_cast %52 : i32 to index
      %c0_47 = arith.constant 0 : index
      %c0_48 = arith.constant 0 : index
      %57 = vector.load %arg15[%56, %c0_47, %c0_48] : memref<4x8x96xf32, #tpu.memory_space<vmem>>, vector<1x8x96xf32>
      %58 = vector.shape_cast %57 : vector<1x8x96xf32> to vector<8x96xf32>
      %cst_49 = arith.constant dense<0.000000e+00> : vector<8x48xf32>
      %59 = tpu.matmul %arg19, %9, %cst_49 {dimension_numbers = #tpu.dot_dimension_numbers<[1], [0], [0], [1], [0, 0, 1, 1], [], []>} : vector<8x16xf32>, vector<16x48xf32>, vector<8x48xf32> -> vector<8x48xf32>
      %60 = vector.broadcast %10 : vector<1x48xf32> to vector<8x48xf32>
      %61 = arith.addf %59, %60 : vector<8x48xf32>
      %cst_50 = arith.constant dense<0.000000e+00> : vector<8x48xf32>
      %62 = tpu.matmul %arg20, %11, %cst_50 {dimension_numbers = #tpu.dot_dimension_numbers<[1], [0], [0], [1], [0, 0, 1, 1], [], []>} : vector<8x16xf32>, vector<16x48xf32>, vector<8x48xf32> -> vector<8x48xf32>
      %63 = vector.broadcast %12 : vector<1x48xf32> to vector<8x48xf32>
      %64 = arith.addf %62, %63 : vector<8x48xf32>
      %65 = vector.extract_strided_slice %55 {offsets = [0, 0], sizes = [8, 16], strides = [1, 1]} : vector<8x96xf32> to vector<8x16xf32>
      %66 = vector.extract_strided_slice %61 {offsets = [0, 0], sizes = [8, 16], strides = [1, 1]} : vector<8x48xf32> to vector<8x16xf32>
      %67 = arith.addf %65, %66 : vector<8x16xf32>
      %68 = arith.negf %67 : vector<8x16xf32>
      %69 = math.exp %68 : vector<8x16xf32>
      %cst_51 = arith.constant 1.000000e+00 : f32
      %70 = vector.broadcast %cst_51 : f32 to vector<8x16xf32>
      %71 = arith.addf %70, %69 : vector<8x16xf32>
      %72 = arith.divf %70, %71 : vector<8x16xf32>
      %73 = vector.extract_strided_slice %55 {offsets = [0, 16], sizes = [8, 16], strides = [1, 1]} : vector<8x96xf32> to vector<8x16xf32>
      %74 = vector.extract_strided_slice %61 {offsets = [0, 16], sizes = [8, 16], strides = [1, 1]} : vector<8x48xf32> to vector<8x16xf32>
      %75 = arith.addf %73, %74 : vector<8x16xf32>
      %76 = arith.negf %75 : vector<8x16xf32>
      %77 = math.exp %76 : vector<8x16xf32>
      %cst_52 = arith.constant 1.000000e+00 : f32
      %78 = vector.broadcast %cst_52 : f32 to vector<8x16xf32>
      %79 = arith.addf %78, %77 : vector<8x16xf32>
      %80 = arith.divf %78, %79 : vector<8x16xf32>
      %81 = vector.extract_strided_slice %55 {offsets = [0, 32], sizes = [8, 16], strides = [1, 1]} : vector<8x96xf32> to vector<8x16xf32>
      %82 = vector.extract_strided_slice %61 {offsets = [0, 32], sizes = [8, 16], strides = [1, 1]} : vector<8x48xf32> to vector<8x16xf32>
      %83 = arith.mulf %72, %82 : vector<8x16xf32>
      %84 = arith.addf %81, %83 : vector<8x16xf32>
      %85 = math.tanh %84 : vector<8x16xf32>
      %cst_53 = arith.constant 1.000000e+00 : f32
      %86 = vector.broadcast %cst_53 : f32 to vector<8x16xf32>
      %87 = arith.subf %86, %80 : vector<8x16xf32>
      %88 = arith.mulf %87, %85 : vector<8x16xf32>
      %89 = arith.mulf %80, %arg19 : vector<8x16xf32>
      %90 = arith.addf %88, %89 : vector<8x16xf32>
      %91 = vector.extract_strided_slice %58 {offsets = [0, 48], sizes = [8, 16], strides = [1, 1]} : vector<8x96xf32> to vector<8x16xf32>
      %92 = vector.extract_strided_slice %64 {offsets = [0, 0], sizes = [8, 16], strides = [1, 1]} : vector<8x48xf32> to vector<8x16xf32>
      %93 = arith.addf %91, %92 : vector<8x16xf32>
      %94 = arith.negf %93 : vector<8x16xf32>
      %95 = math.exp %94 : vector<8x16xf32>
      %cst_54 = arith.constant 1.000000e+00 : f32
      %96 = vector.broadcast %cst_54 : f32 to vector<8x16xf32>
      %97 = arith.addf %96, %95 : vector<8x16xf32>
      %98 = arith.divf %96, %97 : vector<8x16xf32>
      %99 = vector.extract_strided_slice %58 {offsets = [0, 64], sizes = [8, 16], strides = [1, 1]} : vector<8x96xf32> to vector<8x16xf32>
      %100 = vector.extract_strided_slice %64 {offsets = [0, 16], sizes = [8, 16], strides = [1, 1]} : vector<8x48xf32> to vector<8x16xf32>
      %101 = arith.addf %99, %100 : vector<8x16xf32>
      %102 = arith.negf %101 : vector<8x16xf32>
      %103 = math.exp %102 : vector<8x16xf32>
      %cst_55 = arith.constant 1.000000e+00 : f32
      %104 = vector.broadcast %cst_55 : f32 to vector<8x16xf32>
      %105 = arith.addf %104, %103 : vector<8x16xf32>
      %106 = arith.divf %104, %105 : vector<8x16xf32>
      %107 = vector.extract_strided_slice %58 {offsets = [0, 80], sizes = [8, 16], strides = [1, 1]} : vector<8x96xf32> to vector<8x16xf32>
      %108 = vector.extract_strided_slice %64 {offsets = [0, 32], sizes = [8, 16], strides = [1, 1]} : vector<8x48xf32> to vector<8x16xf32>
      %109 = arith.mulf %98, %108 : vector<8x16xf32>
      %110 = arith.addf %107, %109 : vector<8x16xf32>
      %111 = math.tanh %110 : vector<8x16xf32>
      %cst_56 = arith.constant 1.000000e+00 : f32
      %112 = vector.broadcast %cst_56 : f32 to vector<8x16xf32>
      %113 = arith.subf %112, %106 : vector<8x16xf32>
      %114 = arith.mulf %113, %111 : vector<8x16xf32>
      %115 = arith.mulf %106, %arg20 : vector<8x16xf32>
      %116 = arith.addf %114, %115 : vector<8x16xf32>
      %117 = arith.index_cast %arg18 : i32 to index
      %c0_57 = arith.constant 0 : index
      %c0_58 = arith.constant 0 : index
      %118 = vector.load %arg16[%117, %c0_57, %c0_58] : memref<4x8x16xf32, #tpu.memory_space<vmem>>, vector<1x8x16xf32>
      %119 = vector.shape_cast %118 : vector<1x8x16xf32> to vector<8x16xf32>
      %120 = vector.shape_cast %90 : vector<8x16xf32> to vector<1x8x16xf32>
      tpu.vector_store %arg16[%117, %c0_57, %c0_58], %120 {strides = array<i32>} : memref<4x8x16xf32, #tpu.memory_space<vmem>>, vector<1x8x16xf32>,
      %121 = arith.index_cast %52 : i32 to index
      %c0_59 = arith.constant 0 : index
      %c0_60 = arith.constant 0 : index
      %122 = vector.load %arg17[%121, %c0_59, %c0_60] : memref<4x8x16xf32, #tpu.memory_space<vmem>>, vector<1x8x16xf32>
      %123 = vector.shape_cast %122 : vector<1x8x16xf32> to vector<8x16xf32>
      %124 = vector.shape_cast %116 : vector<8x16xf32> to vector<1x8x16xf32>
      tpu.vector_store %arg17[%121, %c0_59, %c0_60], %124 {strides = array<i32>} : memref<4x8x16xf32, #tpu.memory_space<vmem>>, vector<1x8x16xf32>,
      scf.yield %90, %116 : vector<8x16xf32>, vector<8x16xf32>
    }
    %c4_i32_24 = arith.constant 4 : i32
    %c0_25 = arith.constant 0 : index
    %c0_26 = arith.constant 0 : index
    %c0_27 = arith.constant 0 : index
    %19 = vector.load %arg16[%c0_25, %c0_26, %c0_27] : memref<4x8x16xf32, #tpu.memory_space<vmem>>, vector<4x8x16xf32>
    %c0_28 = arith.constant 0 : index
    %c0_29 = arith.constant 0 : index
    %c0_30 = arith.constant 0 : index
    %20 = vector.load %arg17[%c0_28, %c0_29, %c0_30] : memref<4x8x16xf32, #tpu.memory_space<vmem>>, vector<4x8x16xf32>
    %21 = tpu.concatenate %19, %20 in 2 : vector<4x8x16xf32>, vector<4x8x16xf32> -> vector<4x8x32xf32>
    %22 = vector.shape_cast %21 : vector<4x8x32xf32> to vector<32x32xf32>
    %cst_31 = arith.constant dense<0.000000e+00> : vector<32x32xf32>
    %23 = tpu.matmul %22, %13, %cst_31 {dimension_numbers = #tpu.dot_dimension_numbers<[1], [0], [0], [1], [0, 0, 1, 1], [], []>} : vector<32x32xf32>, vector<32x32xf32>, vector<32x32xf32> -> vector<32x32xf32>
    %24 = vector.broadcast %14 : vector<1x32xf32> to vector<32x32xf32>
    %25 = arith.addf %23, %24 : vector<32x32xf32>
    %26 = math.tanh %25 : vector<32x32xf32>
    %27 = vector.broadcast %15 : vector<1x32xf32> to vector<32x32xf32>
    %28 = arith.mulf %26, %27 : vector<32x32xf32>
    %cst_32 = arith.constant dense<0.000000e+00> : vector<32xf32>
    %29 = vector.multi_reduction <add>, %28, %cst_32 [1] : vector<32x32xf32> to vector<32xf32>
    %30 = vector.shape_cast %29 : vector<32xf32> to vector<32x1xf32>
    %31 = vector.shape_cast %30 : vector<32x1xf32> to vector<4x8x1xf32>
    %cst_33 = arith.constant dense<0xFF800000> : vector<8x1xf32>
    %32 = vector.multi_reduction <maximumf>, %31, %cst_33 [0] : vector<4x8x1xf32> to vector<8x1xf32>
    %33 = vector.shape_cast %32 : vector<8x1xf32> to vector<1x8x1xf32>
    %34 = vector.broadcast %33 : vector<1x8x1xf32> to vector<4x8x1xf32>
    %35 = arith.subf %31, %34 : vector<4x8x1xf32>
    %36 = math.exp %35 : vector<4x8x1xf32>
    %cst_34 = arith.constant dense<0.000000e+00> : vector<8x1xf32>
    %37 = vector.multi_reduction <add>, %36, %cst_34 [0] : vector<4x8x1xf32> to vector<8x1xf32>
    %38 = vector.shape_cast %37 : vector<8x1xf32> to vector<1x8x1xf32>
    %39 = tpu.reciprocal %38 {approx = true} : vector<1x8x1xf32> -> vector<1x8x1xf32>
    %40 = vector.broadcast %39 : vector<1x8x1xf32> to vector<4x8x1xf32>
    %41 = arith.mulf %36, %40 : vector<4x8x1xf32>
    %42 = vector.broadcast %41 : vector<4x8x1xf32> to vector<4x8x32xf32>
    %43 = arith.mulf %42, %21 : vector<4x8x32xf32>
    %cst_35 = arith.constant dense<0.000000e+00> : vector<8x32xf32>
    %44 = vector.multi_reduction <add>, %43, %cst_35 [0] : vector<4x8x32xf32> to vector<8x32xf32>
    %c0_36 = arith.constant 0 : index
    %c0_37 = arith.constant 0 : index
    %45 = vector.load %arg14[%c0_36, %c0_37] : memref<8x32xf32, #tpu.memory_space<vmem>>, vector<8x32xf32>
    tpu.vector_store %arg14[%c0_36, %c0_37], %44 {strides = array<i32>} : memref<8x32xf32, #tpu.memory_space<vmem>>, vector<8x32xf32>,
    %c0_38 = arith.constant 0 : index
    %c0_39 = arith.constant 0 : index
    %46 = vector.load %arg11[%c0_38, %c0_39] : memref<32x10xf32, #tpu.memory_space<vmem>>, vector<32x10xf32>
    %cst_40 = arith.constant dense<0.000000e+00> : vector<8x10xf32>
    %47 = tpu.matmul %44, %46, %cst_40 {dimension_numbers = #tpu.dot_dimension_numbers<[1], [0], [0], [1], [0, 0, 1, 1], [], []>} : vector<8x32xf32>, vector<32x10xf32>, vector<8x10xf32> -> vector<8x10xf32>
    %c0_41 = arith.constant 0 : index
    %c0_42 = arith.constant 0 : index
    %48 = vector.load %arg12[%c0_41, %c0_42] : memref<1x10xf32, #tpu.memory_space<vmem>>, vector<1x10xf32>
    %49 = vector.broadcast %48 : vector<1x10xf32> to vector<8x10xf32>
    %50 = arith.addf %47, %49 : vector<8x10xf32>
    %c0_43 = arith.constant 0 : index
    %c0_44 = arith.constant 0 : index
    %51 = vector.load %arg13[%c0_43, %c0_44] : memref<8x10xf32, #tpu.memory_space<vmem>>, vector<8x10xf32>
    tpu.vector_store %arg13[%c0_43, %c0_44], %50 {strides = array<i32>} : memref<8x10xf32, #tpu.memory_space<vmem>>, vector<8x10xf32>,
    return
  }
  func.func @transform_0(%arg0: i32) -> (i32, i32, i32) {
    %c0_i32 = arith.constant 0 : i32
    %c0_i32_0 = arith.constant 0 : i32
    %c0_i32_1 = arith.constant 0 : i32
    return %c0_i32, %arg0, %c0_i32_0 : i32, i32, i32
  }
  func.func @transform_1(%arg0: i32) -> (i32, i32) {
    %c0_i32 = arith.constant 0 : i32
    %c0_i32_0 = arith.constant 0 : i32
    %c0_i32_1 = arith.constant 0 : i32
    return %c0_i32, %c0_i32_0 : i32, i32
  }
  func.func @transform_2(%arg0: i32) -> (i32, i32) {
    %c0_i32 = arith.constant 0 : i32
    %c0_i32_0 = arith.constant 0 : i32
    %c0_i32_1 = arith.constant 0 : i32
    return %c0_i32, %c0_i32_0 : i32, i32
  }
  func.func @transform_3(%arg0: i32) -> (i32, i32) {
    %c0_i32 = arith.constant 0 : i32
    %c0_i32_0 = arith.constant 0 : i32
    %c0_i32_1 = arith.constant 0 : i32
    return %c0_i32, %c0_i32_0 : i32, i32
  }
  func.func @transform_4(%arg0: i32) -> (i32, i32) {
    %c0_i32 = arith.constant 0 : i32
    %c0_i32_0 = arith.constant 0 : i32
    %c0_i32_1 = arith.constant 0 : i32
    return %c0_i32, %c0_i32_0 : i32, i32
  }
  func.func @transform_5(%arg0: i32) -> (i32, i32) {
    %c0_i32 = arith.constant 0 : i32
    %c0_i32_0 = arith.constant 0 : i32
    %c0_i32_1 = arith.constant 0 : i32
    return %c0_i32, %c0_i32_0 : i32, i32
  }
  func.func @transform_6(%arg0: i32) -> (i32, i32) {
    %c0_i32 = arith.constant 0 : i32
    %c0_i32_0 = arith.constant 0 : i32
    %c0_i32_1 = arith.constant 0 : i32
    return %c0_i32, %c0_i32_0 : i32, i32
  }
  func.func @transform_7(%arg0: i32) -> (i32, i32) {
    %c0_i32 = arith.constant 0 : i32
    %c0_i32_0 = arith.constant 0 : i32
    %c0_i32_1 = arith.constant 0 : i32
    return %c0_i32, %c0_i32_0 : i32, i32
  }
  func.func @transform_8(%arg0: i32) -> (i32, i32) {
    %c0_i32 = arith.constant 0 : i32
    %c0_i32_0 = arith.constant 0 : i32
    %c0_i32_1 = arith.constant 0 : i32
    return %c0_i32, %c0_i32_0 : i32, i32
  }
  func.func @transform_9(%arg0: i32) -> (i32, i32) {
    %c0_i32 = arith.constant 0 : i32
    %c0_i32_0 = arith.constant 0 : i32
    %c0_i32_1 = arith.constant 0 : i32
    return %c0_i32, %c0_i32_0 : i32, i32
  }
  func.func @transform_10(%arg0: i32) -> (i32, i32) {
    %c0_i32 = arith.constant 0 : i32
    %c0_i32_0 = arith.constant 0 : i32
    %c0_i32_1 = arith.constant 0 : i32
    return %c0_i32, %c0_i32_0 : i32, i32
  }
  func.func @transform_11(%arg0: i32) -> (i32, i32) {
    %c0_i32 = arith.constant 0 : i32
    %c0_i32_0 = arith.constant 0 : i32
    %c0_i32_1 = arith.constant 0 : i32
    return %c0_i32, %c0_i32_0 : i32, i32
  }
  func.func @transform_12(%arg0: i32) -> (i32, i32) {
    %c0_i32 = arith.constant 0 : i32
    %c0_i32_0 = arith.constant 0 : i32
    return %arg0, %c0_i32 : i32, i32
  }
  func.func @transform_13(%arg0: i32) -> (i32, i32) {
    %c0_i32 = arith.constant 0 : i32
    %c0_i32_0 = arith.constant 0 : i32
    return %arg0, %c0_i32 : i32, i32
  }
}

</mosaic_0001>

<llo_original>
// kernel: hier_att_net.3
$region0: #{hier_att_net.3}
  #allocation0 [shape = 'u32[]', space=smem, size = 0x4, offset = 0x4, fixed_abs, tag = 'smem constant byte address 0x4 - core index']
  #allocation1 [shape = 'u32[72,128]{1,0:T(1,128)}', space=vmem, size = 0x9000, scoped, tag = 'internal scratch']
  #allocation2 [shape = 'f32[4,8,96]{2,1,0:T(8,128)}', space=vmem, size = 0x4000, scoped, tag = 'scratch operand']
  #allocation3 [shape = 'f32[4,8,16]{2,1,0:T(8,128)}', space=vmem, size = 0x4000, scoped, tag = 'scratch operand']
  #allocation4 [shape = 'f32[4,8,16]{2,1,0:T(8,128)}', space=vmem, size = 0x4000, scoped, tag = 'scratch operand']
  %s0 = inlined_call_operand.vmem [shape: f32[4,8,32], index: 0, kind: input, shape index: {}]
  %s1 = inlined_call_operand.vmem [shape: f32[32,96], index: 1, kind: input, shape index: {}]
  %s2 = inlined_call_operand.vmem [shape: f32[1,96], index: 2, kind: input, shape index: {}]
  %s3 = inlined_call_operand.vmem [shape: f32[16,48], index: 3, kind: input, shape index: {}]
  %s4 = inlined_call_operand.vmem [shape: f32[1,48], index: 4, kind: input, shape index: {}]
  %s5 = inlined_call_operand.vmem [shape: f32[16,48], index: 5, kind: input, shape index: {}]
  %s6 = inlined_call_operand.vmem [shape: f32[1,48], index: 6, kind: input, shape index: {}]
  %s7 = inlined_call_operand.vmem [shape: f32[32,32], index: 7, kind: input, shape index: {}]
  %s8 = inlined_call_operand.vmem [shape: f32[1,32], index: 8, kind: input, shape index: {}]
  %s9 = inlined_call_operand.vmem [shape: f32[1,32], index: 9, kind: input, shape index: {}]
  %s10 = inlined_call_operand.vmem [shape: f32[32,10], index: 10, kind: input, shape index: {}]
  %s11 = inlined_call_operand.vmem [shape: f32[1,10], index: 11, kind: input, shape index: {}]
  %s12 = inlined_call_operand.vmem [shape: f32[8,10], index: 12, kind: output, shape index: {0}]
  %s13 = inlined_call_operand.vmem [shape: f32[8,32], index: 13, kind: output, shape index: {1}]
  %14 = xla_tuple %s12, %s13
  %s15 = sld [smem:[#allocation0]]
  $region73: #{hier_att_net.3} parent=0
    _
  %s17 = ssub.s32 1, %s15
  %s18 = scalar_select 0, %s17, %s15
  // Predicated region
  $region2: #{hier_att_net.3} parent=0 // pred_check
    _
  $region3: #{hier_att_net.3} parent=0 // pred_check_branch
    %20 = sbr.rel (0) target = $region5
  $region4: #{hier_att_net.3} parent=0 // pred_region
    _
  $region5: #{hier_att_net.3} parent=0 // pred_fallthru
    _
  // Predicated region
  $region6: #{hier_att_net.3} parent=0 // pred_check
    _
  $region7: #{hier_att_net.3} parent=0 // pred_check_branch
    %22 = sbr.rel (0) target = $region9
  $region8: #{hier_att_net.3} parent=0 // pred_region
    _
  $region9: #{hier_att_net.3} parent=0 // pred_fallthru
    _
  // Predicated region
  $region10: #{hier_att_net.3} parent=0 // pred_check
    _
  $region11: #{hier_att_net.3} parent=0 // pred_check_branch
    %24 = sbr.rel (0) target = $region13
  $region12: #{hier_att_net.3} parent=0 // pred_region
    _
  $region13: #{hier_att_net.3} parent=0 // pred_fallthru
    _
  // Predicated region
  $region14: #{hier_att_net.3} parent=0 // pred_check
    _
  $region15: #{hier_att_net.3} parent=0 // pred_check_branch
    %26 = sbr.rel (0) target = $region17
  $region16: #{hier_att_net.3} parent=0 // pred_region
    _
  $region17: #{hier_att_net.3} parent=0 // pred_fallthru
    _
  // Predicated region
  $region18: #{hier_att_net.3} parent=0 // pred_check
    _
  $region19: #{hier_att_net.3} parent=0 // pred_check_branch
    %28 = sbr.rel (0) target = $region21
  $region20: #{hier_att_net.3} parent=0 // pred_region
    _
  $region21: #{hier_att_net.3} parent=0 // pred_fallthru
    _
  // Predicated region
  $region22: #{hier_att_net.3} parent=0 // pred_check
    _
  $region23: #{hier_att_net.3} parent=0 // pred_check_branch
    %30 = sbr.rel (0) target = $region25
  $region24: #{hier_att_net.3} parent=0 // pred_region
    _
  $region25: #{hier_att_net.3} parent=0 // pred_fallthru
    _
  // Predicated region
  $region26: #{hier_att_net.3} parent=0 // pred_check
    _
  $region27: #{hier_att_net.3} parent=0 // pred_check_branch
    %32 = sbr.rel (0) target = $region29
  $region28: #{hier_att_net.3} parent=0 // pred_region
    _
  $region29: #{hier_att_net.3} parent=0 // pred_fallthru
    _
  // Predicated region
  $region30: #{hier_att_net.3} parent=0 // pred_check
    _
  $region31: #{hier_att_net.3} parent=0 // pred_check_branch
    %34 = sbr.rel (0) target = $region33
  $region32: #{hier_att_net.3} parent=0 // pred_region
    _
  $region33: #{hier_att_net.3} parent=0 // pred_fallthru
    _
  // Predicated region
  $region34: #{hier_att_net.3} parent=0 // pred_check
    _
  $region35: #{hier_att_net.3} parent=0 // pred_check_branch
    %36 = sbr.rel (0) target = $region37
  $region36: #{hier_att_net.3} parent=0 // pred_region
    _
  $region37: #{hier_att_net.3} parent=0 // pred_fallthru
    _
  // Predicated region
  $region38: #{hier_att_net.3} parent=0 // pred_check
    _
  $region39: #{hier_att_net.3} parent=0 // pred_check_branch
    %38 = sbr.rel (0) target = $region41
  $region40: #{hier_att_net.3} parent=0 // pred_region
    _
  $region41: #{hier_att_net.3} parent=0 // pred_fallthru
    _
  // Predicated region
  $region42: #{hier_att_net.3} parent=0 // pred_check
    _
  $region43: #{hier_att_net.3} parent=0 // pred_check_branch
    %40 = sbr.rel (0) target = $region45
  $region44: #{hier_att_net.3} parent=0 // pred_region
    _
  $region45: #{hier_att_net.3} parent=0 // pred_fallthru
    _
  // Predicated region
  $region46: #{hier_att_net.3} parent=0 // pred_check
    _
  $region47: #{hier_att_net.3} parent=0 // pred_check_branch
    %42 = sbr.rel (0) target = $region49
  $region48: #{hier_att_net.3} parent=0 // pred_region
    _
  $region49: #{hier_att_net.3} parent=0 // pred_fallthru
    _
  %v43 = vld [vmem:[%s0] sm:$0xff]
  %v44 = vld [vmem:[%s0 + $0x8] sm:$0xff]
  %v45 = vld [vmem:[%s0 + $0x10] sm:$0xff]
  %v46 = vld [vmem:[%s0 + $0x18] sm:$0xff]
  %v47 = vld [vmem:[%s1] sm:$0xff]
  %v48 = vld [vmem:[%s1 + $0x8] sm:$0xff]
  %v49 = vld [vmem:[%s1 + $0x10] sm:$0xff]
  %v50 = vld [vmem:[%s1 + $0x18] sm:$0xff]
  %v51 = vld [vmem:[%s2] sm:$0x1]
  %v53 = vperm.slane %v51, 0
  %vm55 = vcmask 261120
  %v57 = vsel %vm55, %v43, 0
  %v60 = vsel %vm55, %v44, 0
  %v63 = vsel %vm55, %v45, 0
  %v66 = vsel %vm55, %v46, 0
  %68 = vmatpush.msra.mxu0 0.0
  %69 = vmatpush.msra.mxu0 0.0
  %70 = vmatpush.msra.mxu0 0.0
  %71 = vmatpush.msra.mxu0 0.0
  %72 = vmatpush.msra.mxu0 0.0
  %73 = vmatpush.msra.mxu0 0.0
  %74 = vmatpush.msra.mxu0 0.0
  %75 = vmatpush.msra.mxu0 0.0
  %76 = vmatpush.msra.mxu0 0.0
  %77 = vmatpush.msra.mxu0 0.0
  %78 = vmatpush.msra.mxu0 0.0
  %79 = vmatpush.msra.mxu0 0.0
  %80 = vmatpush.msra.mxu0 %v50
  %81 = vmatpush.msra.mxu0 %v49
  %82 = vmatpush.msra.mxu0 %v48
  %83 = vmatpush.msra.mxu0 %v47
  %84 = vmatmul.f32.gmra.mxu0 %v57
  %v85 = vpop.f32.mrf.mxu0
  %v86 = vadd.f32 %v53, %v85
  %87 = vmatmul.f32.gmra.mxu0 %v60
  %v88 = vpop.f32.mrf.mxu0
  %v89 = vadd.f32 %v53, %v88
  %90 = vmatmul.f32.gmra.mxu0 %v63
  %v91 = vpop.f32.mrf.mxu0
  %v92 = vadd.f32 %v53, %v91
  %93 = vmatmul.f32.gmra.mxu0 %v66
  %v94 = vpop.f32.mrf.mxu0
  %v95 = vadd.f32 %v53, %v94
  %96 = vdwg.mxu0
  %vm97 = vcmask 785408
  %98 = vst.msk [vmem:[#allocation2] sm:$0xff] %vm97, %v86
  %99 = vst.msk [vmem:[#allocation2 + $0x8] sm:$0xff] %vm97, %v89
  %100 = vst.msk [vmem:[#allocation2 + $0x10] sm:$0xff] %vm97, %v92
  %101 = vst.msk [vmem:[#allocation2 + $0x18] sm:$0xff] %vm97, %v95
  %v102 = vld [vmem:[%s3] sm:$0xff]
  %v103 = vld [vmem:[%s3 + $0x8] sm:$0xff]
  %v104 = vld [vmem:[%s4] sm:$0x1]
  %v105 = vld [vmem:[%s5] sm:$0xff]
  %v106 = vld [vmem:[%s5 + $0x8] sm:$0xff]
  %v107 = vld [vmem:[%s6] sm:$0x1]
  %v108 = vld [vmem:[%s7] sm:$0xff]
  %v109 = vld [vmem:[%s7 + $0x8] sm:$0xff]
  %v110 = vld [vmem:[%s7 + $0x10] sm:$0xff]
  %v111 = vld [vmem:[%s7 + $0x18] sm:$0xff]
  %v112 = vld [vmem:[%s8] sm:$0x1]
  %v113 = vld [vmem:[%s9] sm:$0x1]
  loop: start=0, step=1, limit=4
  $region50: #{hier_att_net.3} parent=0 // loop_pre_header
    _
  $region51: #{hier_att_net.3} parent=0 // loop_header
    %s115 = sphi 0, %s119
    %p116 = scmp.ge.s32.totalorder %s115, 4
    %v120 = vphi 0.0, %v224
    %v121 = vphi 0.0, %v266
  $region52: #{hier_att_net.3} parent=0 // loop_header_branch
    %118 = sbr.rel (%p116) target = $region56
  $region53: #{hier_att_net.3} parent=0 // loop_body
    %s122 = ssub.s32 3, %s115
    %s123 = smul.u32 %s115, 8
    %s124 = scalar_lea.vmem [#allocation2], %s123
    %v125 = vld [vmem:[%s124] sm:$0xff]
    %s126 = smul.u32 %s122, 8
    %s127 = scalar_lea.vmem [#allocation2], %s126
    %v128 = vld [vmem:[%s127] sm:$0xff]
    %v130 = vperm.slane %v104, 0
    %133 = vrot.lane.b32.xlu0 %v120, 112
    %v134 = vpop.permute.xlu0 %133
    %vm135 = vcmask 130048
    %v136 = vsel %vm135, %v134, 0
    %138 = vmatpush.msra.mxu0 0.0
    %139 = vmatpush.msra.mxu0 0.0
    %140 = vmatpush.msra.mxu0 0.0
    %141 = vmatpush.msra.mxu0 0.0
    %142 = vmatpush.msra.mxu0 0.0
    %143 = vmatpush.msra.mxu0 0.0
    %144 = vmatpush.msra.mxu0 0.0
    %145 = vmatpush.msra.mxu0 0.0
    %146 = vmatpush.msra.mxu0 0.0
    %147 = vmatpush.msra.mxu0 0.0
    %148 = vmatpush.msra.mxu0 0.0
    %149 = vmatpush.msra.mxu0 0.0
    %150 = vmatpush.msra.mxu0 0.0
    %151 = vmatpush.msra.mxu0 0.0
    %152 = vmatpush.msra.mxu0 %v103
    %153 = vmatpush.msra.mxu0 %v102
    %154 = vmatmul.f32.gmra.mxu0 %v136
    %v155 = vpop.f32.mrf.mxu0
    %v156 = vadd.f32 %v130, %v155
    %157 = vdwg.mxu0
    %v159 = vperm.slane %v107, 0
    %162 = vrot.lane.b32.xlu0 %v121, 64
    %v163 = vpop.permute.xlu0 %162
    %v164 = vsel %vm135, %v163, 0
    %166 = vmatpush.msra.mxu0 0.0
    %167 = vmatpush.msra.mxu0 0.0
    %168 = vmatpush.msra.mxu0 0.0
    %169 = vmatpush.msra.mxu0 0.0
    %170 = vmatpush.msra.mxu0 0.0
    %171 = vmatpush.msra.mxu0 0.0
    %172 = vmatpush.msra.mxu0 0.0
    %173 = vmatpush.msra.mxu0 0.0
    %174 = vmatpush.msra.mxu0 0.0
    %175 = vmatpush.msra.mxu0 0.0
    %176 = vmatpush.msra.mxu0 0.0
    %177 = vmatpush.msra.mxu0 0.0
    %178 = vmatpush.msra.mxu0 0.0
    %179 = vmatpush.msra.mxu0 0.0
    %180 = vmatpush.msra.mxu0 %v106
    %181 = vmatpush.msra.mxu0 %v105
    %182 = vmatmul.f32.gmra.mxu0 %v164
    %v183 = vpop.f32.mrf.mxu0
    %v184 = vadd.f32 %v159, %v183
    %185 = vdwg.mxu0
    %v186 = vadd.f32 %v125, %v156
    %v187 = vxor.u32 %v186, 2147483648
    %v188 = vmul.f32 %v187, 1.442695
    %v189 = vpow.pop %v188
    %v190 = vadd.f32 %v189, 1.0
    %v191 = vrcp.pop %v190
    %v192 = vmul.f32 %v190, %v191
    %v193 = vsub.f32 1.0, %v192
    %v194 = vmul.f32 %v191, %v193
    %v195 = vadd.f32 %v191, %v194
    %vm196 = vweird.f32 %v190
    %vm197 = vweird.f32 %v191
    %vm198 = vmor %vm196, %vm197
    %v199 = vsel %vm198, %v191, %v195
    %v200 = vand.u32 2147483647, %v190
    %vm201 = vcmp.eq.f32.partialorder %v200, 8.507059e+37
    %v202 = vand.u32 %v190, 2147483648
    %v203 = vor.u32 1.1754944e-38, %v202
    %v204 = vsel %vm201, %v203, %v199
    %v205 = vmul.f32 1.0, %v204
    %207 = vrot.lane.b32.xlu0 %v156, 96
    %v208 = vpop.permute.xlu0 %207
    %v210 = vmul.f32 %v205, %v208
    %212 = vrot.lane.b32.xlu0 %v210, 32
    %v213 = vpop.permute.xlu0 %212
    %v215 = vadd.f32 %v125, %v213
    %v216 = vtanh.pop %v215
    %v217 = vsub.f32 1.0, %v205
    %219 = vrot.lane.b32.xlu0 %v216, 112
    %v220 = vpop.permute.xlu0 %219
    %v222 = vmul.f32 %v217, %v220
    %v223 = vmul.f32 %v205, %v120
    %v224 = vadd.f32 %v222, %v223
    %226 = vrot.lane.b32.xlu0 %v184, 48
    %v227 = vpop.permute.xlu0 %226
    %v229 = vadd.f32 %v128, %v227
    %v230 = vxor.u32 %v229, 2147483648
    %v231 = vmul.f32 %v230, 1.442695
    %v232 = vpow.pop %v231
    %v233 = vadd.f32 %v232, 1.0
    %v234 = vrcp.pop %v233
    %v235 = vmul.f32 %v233, %v234
    %v236 = vsub.f32 1.0, %v235
    %v237 = vmul.f32 %v234, %v236
    %v238 = vadd.f32 %v234, %v237
    %vm239 = vweird.f32 %v233
    %vm240 = vweird.f32 %v234
    %vm241 = vmor %vm239, %vm240
    %v242 = vsel %vm241, %v234, %v238
    %v243 = vand.u32 2147483647, %v233
    %vm244 = vcmp.eq.f32.partialorder %v243, 8.507059e+37
    %v245 = vand.u32 %v233, 2147483648
    %v246 = vor.u32 1.1754944e-38, %v245
    %v247 = vsel %vm244, %v246, %v242
    %v248 = vmul.f32 1.0, %v247
    %249 = vrot.lane.b32.xlu0 %v184, 16
    %v250 = vpop.permute.xlu0 %249
    %v252 = vmul.f32 %v248, %v250
    %254 = vrot.lane.b32.xlu0 %v252, 32
    %v255 = vpop.permute.xlu0 %254
    %v257 = vadd.f32 %v128, %v255
    %v258 = vtanh.pop %v257
    %v259 = vsub.f32 1.0, %v248
    %261 = vrot.lane.b32.xlu0 %v258, 112
    %v262 = vpop.permute.xlu0 %261
    %v264 = vmul.f32 %v259, %v262
    %v265 = vmul.f32 %v248, %v121
    %v266 = vadd.f32 %v264, %v265
    %268 = vrot.lane.b32.xlu0 %v224, 112
    %v269 = vpop.permute.xlu0 %268
    %s271 = scalar_lea.vmem [#allocation3], %s123
    %272 = vst.msk [vmem:[%s271] sm:$0xff] %vm135, %v269
    %274 = vrot.lane.b32.xlu0 %v266, 64
    %v275 = vpop.permute.xlu0 %274
    %s277 = scalar_lea.vmem [#allocation4], %s126
    %278 = vst.msk [vmem:[%s277] sm:$0xff] %vm135, %v275
  $region54: #{hier_att_net.3} parent=0 // loop_footer
    %s119 = sadd.s32 1, %s115
  $region55: #{hier_att_net.3} parent=0 // loop_footer_branch
    %114 = sbr.rel target = $region51
  $region56: #{hier_att_net.3} parent=0 // loop_exit
    _
  %v279 = vld [vmem:[#allocation3] sm:$0xff]
  %v280 = vld [vmem:[#allocation3 + $0x8] sm:$0xff]
  %v281 = vld [vmem:[#allocation3 + $0x10] sm:$0xff]
  %v282 = vld [vmem:[#allocation3 + $0x18] sm:$0xff]
  %v283 = vld [vmem:[#allocation4] sm:$0xff]
  %v284 = vld [vmem:[#allocation4 + $0x8] sm:$0xff]
  %v285 = vld [vmem:[#allocation4 + $0x10] sm:$0xff]
  %v286 = vld [vmem:[#allocation4 + $0x18] sm:$0xff]
  %291 = vrot.lane.b32.xlu0 %v283, 16
  %v292 = vpop.permute.xlu0 %291
  %293 = vrot.lane.b32.xlu0 %v284, 16
  %v294 = vpop.permute.xlu0 %293
  %295 = vrot.lane.b32.xlu0 %v285, 16
  %v296 = vpop.permute.xlu0 %295
  %297 = vrot.lane.b32.xlu0 %v286, 16
  %v298 = vpop.permute.xlu0 %297
  %vm303 = vcmask 130048
  %v304 = vsel %vm303, %v279, %v292
  %v305 = vsel %vm303, %v280, %v294
  %v306 = vsel %vm303, %v281, %v296
  %v307 = vsel %vm303, %v282, %v298
  %v309 = vperm.slane %v112, 0
  %v312 = vsel %vm55, %v304, 0
  %v315 = vsel %vm55, %v305, 0
  %v318 = vsel %vm55, %v306, 0
  %v321 = vsel %vm55, %v307, 0
  %323 = vmatpush.msra.mxu0 0.0
  %324 = vmatpush.msra.mxu0 0.0
  %325 = vmatpush.msra.mxu0 0.0
  %326 = vmatpush.msra.mxu0 0.0
  %327 = vmatpush.msra.mxu0 0.0
  %328 = vmatpush.msra.mxu0 0.0
  %329 = vmatpush.msra.mxu0 0.0
  %330 = vmatpush.msra.mxu0 0.0
  %331 = vmatpush.msra.mxu0 0.0
  %332 = vmatpush.msra.mxu0 0.0
  %333 = vmatpush.msra.mxu0 0.0
  %334 = vmatpush.msra.mxu0 0.0
  %335 = vmatpush.msra.mxu0 %v111
  %336 = vmatpush.msra.mxu0 %v110
  %337 = vmatpush.msra.mxu0 %v109
  %338 = vmatpush.msra.mxu0 %v108
  %339 = vmatmul.f32.gmra.mxu0 %v312
  %v340 = vpop.f32.mrf.mxu0
  %v341 = vadd.f32 %v309, %v340
  %342 = vmatmul.f32.gmra.mxu0 %v315
  %v343 = vpop.f32.mrf.mxu0
  %v344 = vadd.f32 %v309, %v343
  %345 = vmatmul.f32.gmra.mxu0 %v318
  %v346 = vpop.f32.mrf.mxu0
  %v347 = vadd.f32 %v309, %v346
  %348 = vmatmul.f32.gmra.mxu0 %v321
  %v349 = vpop.f32.mrf.mxu0
  %v350 = vadd.f32 %v309, %v349
  %351 = vdwg.mxu0
  %v352 = vtanh.pop %v341
  %v353 = vtanh.pop %v344
  %v354 = vtanh.pop %v347
  %v355 = vtanh.pop %v350
  %v357 = vperm.slane %v113, 0
  %v359 = vmul.f32 %v352, %v357
  %v360 = vmul.f32 %v353, %v357
  %v361 = vmul.f32 %v354, %v357
  %v362 = vmul.f32 %v355, %v357
  %v363 = vsel %vm55, %v359, 0.0
  %364 = vadd.xlane.f32.xlu0 %v363
  %v365 = vpop.xlane.xlu0 %364
  %v366 = vsel %vm55, %v360, 0.0
  %367 = vadd.xlane.f32.xlu0 %v366
  %v368 = vpop.xlane.xlu0 %367
  %v369 = vsel %vm55, %v361, 0.0
  %370 = vadd.xlane.f32.xlu0 %v369
  %v371 = vpop.xlane.xlu0 %370
  %v372 = vsel %vm55, %v362, 0.0
  %373 = vadd.xlane.f32.xlu0 %v372
  %v374 = vpop.xlane.xlu0 %373
  %v375 = vmax.f32 %v365, %v368
  %v376 = vmax.f32 %v371, %v374
  %v377 = vmax.f32 %v375, %v376
  %v378 = vsub.f32 %v365, %v377
  %v379 = vsub.f32 %v368, %v377
  %v380 = vsub.f32 %v371, %v377
  %v381 = vsub.f32 %v374, %v377
  %v382 = vmul.f32 %v378, 1.442695
  %v383 = vpow.pop %v382
  %v384 = vmul.f32 %v379, 1.442695
  %v385 = vpow.pop %v384
  %v386 = vmul.f32 %v380, 1.442695
  %v387 = vpow.pop %v386
  %v388 = vmul.f32 %v381, 1.442695
  %v389 = vpow.pop %v388
  %v390 = vadd.f32 %v383, %v385
  %v391 = vadd.f32 %v390, %v387
  %v392 = vadd.f32 %v391, %v389
  %v393 = vrcp.pop %v392
  %v394 = vmul.f32 %v383, %v393
  %v395 = vmul.f32 %v385, %v393
  %v396 = vmul.f32 %v387, %v393
  %v397 = vmul.f32 %v389, %v393
  %v398 = vmul.f32 %v394, %v304
  %v399 = vmul.f32 %v395, %v305
  %v400 = vmul.f32 %v396, %v306
  %v401 = vmul.f32 %v397, %v307
  %v402 = vsel %vm55, %v398, 0.0
  %v403 = vsel %vm55, %v399, 0.0
  %v404 = vadd.f32 %v402, %v403
  %v405 = vsel %vm55, %v400, 0.0
  %v406 = vadd.f32 %v404, %v405
  %v407 = vsel %vm55, %v401, 0.0
  %v408 = vadd.f32 %v406, %v407
  %409 = vst.msk [vmem:[%s13] sm:$0xff] %vm55, %v408
  %v410 = vld [vmem:[%s10] sm:$0xff]
  %v411 = vld [vmem:[%s10 + $0x8] sm:$0xff]
  %v412 = vld [vmem:[%s10 + $0x10] sm:$0xff]
  %v413 = vld [vmem:[%s10 + $0x18] sm:$0xff]
  %v414 = vld [vmem:[%s11] sm:$0x1]
  %v416 = vperm.slane %v414, 0
  %v419 = vsel %vm55, %v408, 0
  %421 = vmatpush.msra.mxu0 0.0
  %422 = vmatpush.msra.mxu0 0.0
  %423 = vmatpush.msra.mxu0 0.0
  %424 = vmatpush.msra.mxu0 0.0
  %425 = vmatpush.msra.mxu0 0.0
  %426 = vmatpush.msra.mxu0 0.0
  %427 = vmatpush.msra.mxu0 0.0
  %428 = vmatpush.msra.mxu0 0.0
  %429 = vmatpush.msra.mxu0 0.0
  %430 = vmatpush.msra.mxu0 0.0
  %431 = vmatpush.msra.mxu0 0.0
  %432 = vmatpush.msra.mxu0 0.0
  %433 = vmatpush.msra.mxu0 %v413
  %434 = vmatpush.msra.mxu0 %v412
  %435 = vmatpush.msra.mxu0 %v411
  %436 = vmatpush.msra.mxu0 %v410
  %437 = vmatmul.f32.gmra.mxu0 %v419
  %v438 = vpop.f32.mrf.mxu0
  %v439 = vadd.f32 %v416, %v438
  %440 = vdwg.mxu0
  %vm441 = vcmask 80896
  %442 = vst.msk [vmem:[%s12] sm:$0xff] %vm441, %v439
  // Predicated region
  $region57: #{hier_att_net.3} parent=0 // pred_check
    _
  $region58: #{hier_att_net.3} parent=0 // pred_check_branch
    %444 = sbr.rel (0) target = $region60
  $region59: #{hier_att_net.3} parent=0 // pred_region
    _
  $region60: #{hier_att_net.3} parent=0 // pred_fallthru
    _
  // Predicated region
  $region61: #{hier_att_net.3} parent=0 // pred_check
    _
  $region62: #{hier_att_net.3} parent=0 // pred_check_branch
    %446 = sbr.rel (0) target = $region64
  $region63: #{hier_att_net.3} parent=0 // pred_region
    _
  $region64: #{hier_att_net.3} parent=0 // pred_fallthru
    _
  // Predicated region
  $region65: #{hier_att_net.3} parent=0 // pred_check
    _
  $region66: #{hier_att_net.3} parent=0 // pred_check_branch
    %448 = sbr.rel (0) target = $region68
  $region67: #{hier_att_net.3} parent=0 // pred_region
    _
  $region68: #{hier_att_net.3} parent=0 // pred_fallthru
    _
  // Predicated region
  $region69: #{hier_att_net.3} parent=0 // pred_check
    _
  $region70: #{hier_att_net.3} parent=0 // pred_check_branch
    %450 = sbr.rel (0) target = $region72
  $region71: #{hier_att_net.3} parent=0 // pred_region
    _
  $region72: #{hier_att_net.3} parent=0 // pred_fallthru
    _

// kernel: hier_att_net.2
$region0: #{hier_att_net.2}
  #allocation0 [shape = 'u32[]', space=smem, size = 0x4, offset = 0x4, fixed_abs, tag = 'smem constant byte address 0x4 - core index']
  #allocation1 [shape = 'u32[72,128]{1,0:T(1,128)}', space=vmem, size = 0x9000, scoped, tag = 'internal scratch']
  #allocation2 [shape = 'f32[8,16,96]{2,1,0:T(8,128)}', space=vmem, size = 0x10000, scoped, tag = 'scratch operand']
  #allocation3 [shape = 'f32[8,16,16]{2,1,0:T(8,128)}', space=vmem, size = 0x10000, scoped, tag = 'scratch operand']
  #allocation4 [shape = 'f32[8,16,16]{2,1,0:T(8,128)}', space=vmem, size = 0x10000, scoped, tag = 'scratch operand']
  %s0 = inlined_call_operand.vmem [shape: f32[8,32,32], index: 0, kind: input, shape index: {}]
  %s1 = inlined_call_operand.vmem [shape: f32[32,96], index: 1, kind: input, shape index: {}]
  %s2 = inlined_call_operand.vmem [shape: f32[1,96], index: 2, kind: input, shape index: {}]
  %s3 = inlined_call_operand.vmem [shape: f32[16,48], index: 3, kind: input, shape index: {}]
  %s4 = inlined_call_operand.vmem [shape: f32[1,48], index: 4, kind: input, shape index: {}]
  %s5 = inlined_call_operand.vmem [shape: f32[16,48], index: 5, kind: input, shape index: {}]
  %s6 = inlined_call_operand.vmem [shape: f32[1,48], index: 6, kind: input, shape index: {}]
  %s7 = inlined_call_operand.vmem [shape: f32[32,32], index: 7, kind: input, shape index: {}]
  %s8 = inlined_call_operand.vmem [shape: f32[1,32], index: 8, kind: input, shape index: {}]
  %s9 = inlined_call_operand.vmem [shape: f32[1,32], index: 9, kind: input, shape index: {}]
  %s10 = inlined_call_operand.vmem [shape: f32[32,32], index: 10, kind: output, shape index: {}]
  %s11 = sld [smem:[#allocation0]]
  $region118: #{hier_att_net.2} parent=0
    _
  %s13 = ssub.s32 1, %s11
  %s14 = scalar_select 0, %s13, %s11
  $region1: #{hier_att_net.2} parent=0
    #allocation5 [shape = 'u8[131072]{0}', space=vmem, size = 0x20000, scoped, tag = 'input window, operand 0']
    loop: start=0, step=1, limit=4
    $region2: #{hier_att_net.2} parent=1 // loop_pre_header
      _
    $region3: #{hier_att_net.2} parent=1 // loop_header
      %s16 = sphi 0, %s20
      %p17 = scmp.ge.s32.totalorder %s16, 4
      %s26 = sphi 0, %s28
      %s29 = sphi 0, %s26
      %s30 = sphi 0, %s29
      %s46 = sphi 0, %s30
      %s50 = sphi 0, %s50
      %s52 = sphi 0, %s50
      %s53 = sphi 0, %s52
      %s67 = sphi 0, %s53
      %s71 = sphi 0, %s71
      %s73 = sphi 0, %s71
      %s74 = sphi 0, %s73
      %s88 = sphi 0, %s74
      %s92 = sphi 0, %s92
      %s94 = sphi 0, %s92
      %s95 = sphi 0, %s94
      %s109 = sphi 0, %s95
      %s113 = sphi 0, %s113
      %s115 = sphi 0, %s113
      %s116 = sphi 0, %s115
      %s130 = sphi 0, %s116
      %s134 = sphi 0, %s134
      %s136 = sphi 0, %s134
      %s137 = sphi 0, %s136
      %s151 = sphi 0, %s137
      %s155 = sphi 0, %s155
      %s157 = sphi 0, %s155
      %s158 = sphi 0, %s157
      %s172 = sphi 0, %s158
      %s176 = sphi 0, %s176
      %s178 = sphi 0, %s176
      %s179 = sphi 0, %s178
      %s193 = sphi 0, %s179
      %s197 = sphi 0, %s197
      %s199 = sphi 0, %s197
      %s200 = sphi 0, %s199
      %s214 = sphi 0, %s200
      %s218 = sphi 0, %s218
      %s220 = sphi 0, %s218
      %s221 = sphi 0, %s220
      %s235 = sphi 0, %s221
      %s241 = sphi 0, %s243
      %s244 = sphi 0, %s241
      %s245 = sphi 0, %s244
      %s261 = sphi 0, %s245
    $region4: #{hier_att_net.2} parent=1 // loop_header_branch
      %19 = sbr.rel (%p17) target = $region8
    $region5: #{hier_att_net.2} parent=1 // loop_body
      %s21 = ssub.s32 %s16, 1
      %s22 = ssub.s32 %s16, 2
      %s23 = sadd.s32 %s16, 1
      %s24 = ssub.s32 %s16, %s23
      %p25 = scmp.eq.s32.totalorder %s24, 0
      %s27 = sadd.s32 %s26, 1
      %s28 = scalar_select %p25, %s26, %s27
      %p31 = pneg %p25
      %p32 = scmp.eq.s32.totalorder %s16, 1
      %p33 = por %p31, %p32
      %p34 = scmp.ne.s32.totalorder %s26, %s29
      %p35 = scmp.eq.s32.totalorder %s16, 0
      %p36 = por %p34, %p35
      %p37 = scmp.ne.s32.totalorder %s26, %s29
      %p38 = scmp.eq.s32.totalorder %s21, 1
      %p39 = por %p37, %p38
      %p40 = scmp.ne.s32.totalorder %s29, %s30
      %p41 = scmp.eq.s32.totalorder %s21, 0
      %p42 = por %p40, %p41
      %p43 = scmp.ne.s32.totalorder %s29, %s30
      %p44 = scmp.eq.s32.totalorder %s22, 1
      %p45 = por %p43, %p44
      %p47 = scmp.ne.s32.totalorder %s30, %s46
      %p48 = scmp.eq.s32.totalorder %s22, 0
      %p49 = por %p47, %p48
      %s51 = sadd.s32 %s50, 1
      %p54 = scmp.eq.s32.totalorder %s16, 1
      %p55 = scmp.ne.s32.totalorder %s50, %s52
      %p56 = scmp.eq.s32.totalorder %s16, 0
      %p57 = por %p55, %p56
      %p58 = scmp.ne.s32.totalorder %s50, %s52
      %p59 = scmp.eq.s32.totalorder %s21, 1
      %p60 = por %p58, %p59
      %p61 = scmp.ne.s32.totalorder %s52, %s53
      %p62 = scmp.eq.s32.totalorder %s21, 0
      %p63 = por %p61, %p62
      %p64 = scmp.ne.s32.totalorder %s52, %s53
      %p65 = scmp.eq.s32.totalorder %s22, 1
      %p66 = por %p64, %p65
      %p68 = scmp.ne.s32.totalorder %s53, %s67
      %p69 = scmp.eq.s32.totalorder %s22, 0
      %p70 = por %p68, %p69
      %s72 = sadd.s32 %s71, 1
      %p75 = scmp.eq.s32.totalorder %s16, 1
      %p76 = scmp.ne.s32.totalorder %s71, %s73
      %p77 = scmp.eq.s32.totalorder %s16, 0
      %p78 = por %p76, %p77
      %p79 = scmp.ne.s32.totalorder %s71, %s73
      %p80 = scmp.eq.s32.totalorder %s21, 1
      %p81 = por %p79, %p80
      %p82 = scmp.ne.s32.totalorder %s73, %s74
      %p83 = scmp.eq.s32.totalorder %s21, 0
      %p84 = por %p82, %p83
      %p85 = scmp.ne.s32.totalorder %s73, %s74
      %p86 = scmp.eq.s32.totalorder %s22, 1
      %p87 = por %p85, %p86
      %p89 = scmp.ne.s32.totalorder %s74, %s88
      %p90 = scmp.eq.s32.totalorder %s22, 0
      %p91 = por %p89, %p90
      %s93 = sadd.s32 %s92, 1
      %p96 = scmp.eq.s32.totalorder %s16, 1
      %p97 = scmp.ne.s32.totalorder %s92, %s94
      %p98 = scmp.eq.s32.totalorder %s16, 0
      %p99 = por %p97, %p98
      %p100 = scmp.ne.s32.totalorder %s92, %s94
      %p101 = scmp.eq.s32.totalorder %s21, 1
      %p102 = por %p100, %p101
      %p103 = scmp.ne.s32.totalorder %s94, %s95
      %p104 = scmp.eq.s32.totalorder %s21, 0
      %p105 = por %p103, %p104
      %p106 = scmp.ne.s32.totalorder %s94, %s95
      %p107 = scmp.eq.s32.totalorder %s22, 1
      %p108 = por %p106, %p107
      %p110 = scmp.ne.s32.totalorder %s95, %s109
      %p111 = scmp.eq.s32.totalorder %s22, 0
      %p112 = por %p110, %p111
      %s114 = sadd.s32 %s113, 1
      %p117 = scmp.eq.s32.totalorder %s16, 1
      %p118 = scmp.ne.s32.totalorder %s113, %s115
      %p119 = scmp.eq.s32.totalorder %s16, 0
      %p120 = por %p118, %p119
      %p121 = scmp.ne.s32.totalorder %s113, %s115
      %p122 = scmp.eq.s32.totalorder %s21, 1
      %p123 = por %p121, %p122
      %p124 = scmp.ne.s32.totalorder %s115, %s116
      %p125 = scmp.eq.s32.totalorder %s21, 0
      %p126 = por %p124, %p125
      %p127 = scmp.ne.s32.totalorder %s115, %s116
      %p128 = scmp.eq.s32.totalorder %s22, 1
      %p129 = por %p127, %p128
      %p131 = scmp.ne.s32.totalorder %s116, %s130
      %p132 = scmp.eq.s32.totalorder %s22, 0
      %p133 = por %p131, %p132
      %s135 = sadd.s32 %s134, 1
      %p138 = scmp.eq.s32.totalorder %s16, 1
      %p139 = scmp.ne.s32.totalorder %s134, %s136
      %p140 = scmp.eq.s32.totalorder %s16, 0
      %p141 = por %p139, %p140
      %p142 = scmp.ne.s32.totalorder %s134, %s136
      %p143 = scmp.eq.s32.totalorder %s21, 1
      %p144 = por %p142, %p143
      %p145 = scmp.ne.s32.totalorder %s136, %s137
      %p146 = scmp.eq.s32.totalorder %s21, 0
      %p147 = por %p145, %p146
      %p148 = scmp.ne.s32.totalorder %s136, %s137
      %p149 = scmp.eq.s32.totalorder %s22, 1
      %p150 = por %p148, %p149
      %p152 = scmp.ne.s32.totalorder %s137, %s151
      %p153 = scmp.eq.s32.totalorder %s22, 0
      %p154 = por %p152, %p153
      %s156 = sadd.s32 %s155, 1
      %p159 = scmp.eq.s32.totalorder %s16, 1
      %p160 = scmp.ne.s32.totalorder %s155, %s157
      %p161 = scmp.eq.s32.totalorder %s16, 0
      %p162 = por %p160, %p161
      %p163 = scmp.ne.s32.totalorder %s155, %s157
      %p164 = scmp.eq.s32.totalorder %s21, 1
      %p165 = por %p163, %p164
      %p166 = scmp.ne.s32.totalorder %s157, %s158
      %p167 = scmp.eq.s32.totalorder %s21, 0
      %p168 = por %p166, %p167
      %p169 = scmp.ne.s32.totalorder %s157, %s158
      %p170 = scmp.eq.s32.totalorder %s22, 1
      %p171 = por %p169, %p170
      %p173 = scmp.ne.s32.totalorder %s158, %s172
      %p174 = scmp.eq.s32.totalorder %s22, 0
      %p175 = por %p173, %p174
      %s177 = sadd.s32 %s176, 1
      %p180 = scmp.eq.s32.totalorder %s16, 1
      %p181 = scmp.ne.s32.totalorder %s176, %s178
      %p182 = scmp.eq.s32.totalorder %s16, 0
      %p183 = por %p181, %p182
      %p184 = scmp.ne.s32.totalorder %s176, %s178
      %p185 = scmp.eq.s32.totalorder %s21, 1
      %p186 = por %p184, %p185
      %p187 = scmp.ne.s32.totalorder %s178, %s179
      %p188 = scmp.eq.s32.totalorder %s21, 0
      %p189 = por %p187, %p188
      %p190 = scmp.ne.s32.totalorder %s178, %s179
      %p191 = scmp.eq.s32.totalorder %s22, 1
      %p192 = por %p190, %p191
      %p194 = scmp.ne.s32.totalorder %s179, %s193
      %p195 = scmp.eq.s32.totalorder %s22, 0
      %p196 = por %p194, %p195
      %s198 = sadd.s32 %s197, 1
      %p201 = scmp.eq.s32.totalorder %s16, 1
      %p202 = scmp.ne.s32.totalorder %s197, %s199
      %p203 = scmp.eq.s32.totalorder %s16, 0
      %p204 = por %p202, %p203
      %p205 = scmp.ne.s32.totalorder %s197, %s199
      %p206 = scmp.eq.s32.totalorder %s21, 1
      %p207 = por %p205, %p206
      %p208 = scmp.ne.s32.totalorder %s199, %s200
      %p209 = scmp.eq.s32.totalorder %s21, 0
      %p210 = por %p208, %p209
      %p211 = scmp.ne.s32.totalorder %s199, %s200
      %p212 = scmp.eq.s32.totalorder %s22, 1
      %p213 = por %p211, %p212
      %p215 = scmp.ne.s32.totalorder %s200, %s214
      %p216 = scmp.eq.s32.totalorder %s22, 0
      %p217 = por %p215, %p216
      %s219 = sadd.s32 %s218, 1
      %p222 = scmp.eq.s32.totalorder %s16, 1
      %p223 = scmp.ne.s32.totalorder %s218, %s220
      %p224 = scmp.eq.s32.totalorder %s16, 0
      %p225 = por %p223, %p224
      %p226 = scmp.ne.s32.totalorder %s218, %s220
      %p227 = scmp.eq.s32.totalorder %s21, 1
      %p228 = por %p226, %p227
      %p229 = scmp.ne.s32.totalorder %s220, %s221
      %p230 = scmp.eq.s32.totalorder %s21, 0
      %p231 = por %p229, %p230
      %p232 = scmp.ne.s32.totalorder %s220, %s221
      %p233 = scmp.eq.s32.totalorder %s22, 1
      %p234 = por %p232, %p233
      %p236 = scmp.ne.s32.totalorder %s221, %s235
      %p237 = scmp.eq.s32.totalorder %s22, 0
      %p238 = por %p236, %p237
      %s239 = ssub.s32 %s16, %s23
      %p240 = scmp.eq.s32.totalorder %s239, 0
      %s242 = sadd.s32 %s241, 1
      %s243 = scalar_select %p240, %s241, %s242
      %p246 = pneg %p240
      %p247 = scmp.eq.s32.totalorder %s16, 1
      %p248 = por %p246, %p247
      %p249 = scmp.ne.s32.totalorder %s241, %s244
      %p250 = scmp.eq.s32.totalorder %s16, 0
      %p251 = por %p249, %p250
      %p252 = scmp.ne.s32.totalorder %s241, %s244
      %p253 = scmp.eq.s32.totalorder %s21, 1
      %p254 = por %p252, %p253
      %p255 = scmp.ne.s32.totalorder %s244, %s245
      %p256 = scmp.eq.s32.totalorder %s21, 0
      %p257 = por %p255, %p256
      %p258 = scmp.ne.s32.totalorder %s244, %s245
      %p259 = scmp.eq.s32.totalorder %s22, 1
      %p260 = por %p258, %p259
      %p262 = scmp.ne.s32.totalorder %s245, %s261
      %p263 = scmp.eq.s32.totalorder %s22, 0
      %p264 = por %p262, %p263
      %p265 = scmp.le.s32.totalorder 1, %s16
      %p266 = scmp.lt.s32.totalorder %s16, 3
      %p267 = pnand %p265, %p266
      %p268 = pneg %p267
      // Predicated region
      $region9: #{hier_att_net.2} parent=5 // pred_check
        _
      $region10: #{hier_att_net.2} parent=5 // pred_check_branch
        %270 = sbr.rel (%p267) target = $region12
      $region11: #{hier_att_net.2} parent=5 // pred_region
        %s271 = ssub.s32 %s16, 1
        // Predicated region
        $region13: #{hier_att_net.2} parent=11 // pred_check
          %p272 = pneg %p63
        $region14: #{hier_att_net.2} parent=11 // pred_check_branch
          %274 = sbr.rel (%p272) target = $region16
        $region15: #{hier_att_net.2} parent=11 // pred_region
          _
        $region16: #{hier_att_net.2} parent=11 // pred_fallthru
          _
        // Predicated region
        $region17: #{hier_att_net.2} parent=11 // pred_check
          %p275 = pneg %p84
        $region18: #{hier_att_net.2} parent=11 // pred_check_branch
          %277 = sbr.rel (%p275) target = $region20
        $region19: #{hier_att_net.2} parent=11 // pred_region
          _
        $region20: #{hier_att_net.2} parent=11 // pred_fallthru
          _
        // Predicated region
        $region21: #{hier_att_net.2} parent=11 // pred_check
          %p278 = pneg %p105
        $region22: #{hier_att_net.2} parent=11 // pred_check_branch
          %280 = sbr.rel (%p278) target = $region24
        $region23: #{hier_att_net.2} parent=11 // pred_region
          _
        $region24: #{hier_att_net.2} parent=11 // pred_fallthru
          _
        // Predicated region
        $region25: #{hier_att_net.2} parent=11 // pred_check
          %p281 = pneg %p126
        $region26: #{hier_att_net.2} parent=11 // pred_check_branch
          %283 = sbr.rel (%p281) target = $region28
        $region27: #{hier_att_net.2} parent=11 // pred_region
          _
        $region28: #{hier_att_net.2} parent=11 // pred_fallthru
          _
        // Predicated region
        $region29: #{hier_att_net.2} parent=11 // pred_check
          %p284 = pneg %p147
        $region30: #{hier_att_net.2} parent=11 // pred_check_branch
          %286 = sbr.rel (%p284) target = $region32
        $region31: #{hier_att_net.2} parent=11 // pred_region
          _
        $region32: #{hier_att_net.2} parent=11 // pred_fallthru
          _
        // Predicated region
        $region33: #{hier_att_net.2} parent=11 // pred_check
          %p287 = pneg %p168
        $region34: #{hier_att_net.2} parent=11 // pred_check_branch
          %289 = sbr.rel (%p287) target = $region36
        $region35: #{hier_att_net.2} parent=11 // pred_region
          _
        $region36: #{hier_att_net.2} parent=11 // pred_fallthru
          _
        // Predicated region
        $region37: #{hier_att_net.2} parent=11 // pred_check
          %p290 = pneg %p189
        $region38: #{hier_att_net.2} parent=11 // pred_check_branch
          %292 = sbr.rel (%p290) target = $region40
        $region39: #{hier_att_net.2} parent=11 // pred_region
          _
        $region40: #{hier_att_net.2} parent=11 // pred_fallthru
          _
        // Predicated region
        $region41: #{hier_att_net.2} parent=11 // pred_check
          %p293 = pneg %p210
        $region42: #{hier_att_net.2} parent=11 // pred_check_branch
          %295 = sbr.rel (%p293) target = $region44
        $region43: #{hier_att_net.2} parent=11 // pred_region
          _
        $region44: #{hier_att_net.2} parent=11 // pred_fallthru
          _
        // Predicated region
        $region45: #{hier_att_net.2} parent=11 // pred_check
          %p296 = pneg %p231
        $region46: #{hier_att_net.2} parent=11 // pred_check_branch
          %298 = sbr.rel (%p296) target = $region48
        $region47: #{hier_att_net.2} parent=11 // pred_region
          _
        $region48: #{hier_att_net.2} parent=11 // pred_fallthru
          _
      $region12: #{hier_att_net.2} parent=5 // pred_fallthru
        _
      %p299 = scmp.lt.s32.totalorder %s16, 2
      // Predicated region
      $region49: #{hier_att_net.2} parent=5 // pred_check
        %p300 = pneg %p299
      $region50: #{hier_att_net.2} parent=5 // pred_check_branch
        %302 = sbr.rel (%p300) target = $region52
      $region51: #{hier_att_net.2} parent=5 // pred_region
        // Predicated region
        $region53: #{hier_att_net.2} parent=51 // pred_check
          %p303 = pneg %p36
        $region54: #{hier_att_net.2} parent=51 // pred_check_branch
          %305 = sbr.rel (%p303) target = $region56
        $region55: #{hier_att_net.2} parent=51 // pred_region
          %s306 = sand.u32 %s26, 1
          %s307 = sand.u32 %s26, 1
          %s308 = smul.addr %s307, 128
          %s309 = scalar_lea.vmem [#allocation5], %s308
          %s310 = smul.u32 2, %s16
          %s311 = smul.addr %s310, 8
          %s312 = scalar_lea.vmem %s0, %s311
          // Predicated region
          $region57: #{hier_att_net.2} parent=55 // pred_check
            _
          $region58: #{hier_att_net.2} parent=55 // pred_check_branch
            %314 = sbr.rel (0) target = $region60
          $region59: #{hier_att_net.2} parent=55 // pred_region
            // Predicated region
            $region61: #{hier_att_net.2} parent=59 // pred_check
              _
            $region62: #{hier_att_net.2} parent=59 // pred_check_branch
              %316 = sbr.rel (0) target = $region64
            $region63: #{hier_att_net.2} parent=59 // pred_region
              // Predicated region
              $region76: #{hier_att_net.2} parent=63 // pred_check
                _
              $region77: #{hier_att_net.2} parent=63 // pred_check_branch
                %362 = sbr.rel (0) target = $region79
              $region78: #{hier_att_net.2} parent=63 // pred_region
                loop: start=0, step=1, limit=1
                $region80: #{hier_att_net.2} parent=78 // loop_pre_header
                  _
                $region81: #{hier_att_net.2} parent=78 // loop_header
                  %s364 = sphi 0, %s368
                  %p365 = scmp.ge.s32.totalorder %s364, 1
                  %s369 = sphi %s312, %s312
                  %s370 = sphi %s309, %s309
                $region82: #{hier_att_net.2} parent=78 // loop_header_branch
                  %367 = sbr.rel (%p365) target = $region86
                $region83: #{hier_att_net.2} parent=78 // loop_body
                  %v371 = vld [vmem:[%s369] sm:$0xff]
                  %372 = vst [vmem:[%s370] sm:$0xff] %v371
                  %v373 = vld [vmem:[%s369 + $0x8] sm:$0xff]
                  %374 = vst [vmem:[%s370 + $0x8] sm:$0xff] %v373
                  %v375 = vld [vmem:[%s369 + $0x20] sm:$0xff]
                  %376 = vst [vmem:[%s370 + $0x10] sm:$0xff] %v375
                  %v377 = vld [vmem:[%s369 + $0x28] sm:$0xff]
                  %378 = vst [vmem:[%s370 + $0x18] sm:$0xff] %v377
                  %v379 = vld [vmem:[%s369 + $0x40] sm:$0xff]
                  %380 = vst [vmem:[%s370 + $0x20] sm:$0xff] %v379
                  %v381 = vld [vmem:[%s369 + $0x48] sm:$0xff]
                  %382 = vst [vmem:[%s370 + $0x28] sm:$0xff] %v381
                  %v383 = vld [vmem:[%s369 + $0x60] sm:$0xff]
                  %384 = vst [vmem:[%s370 + $0x30] sm:$0xff] %v383
                  %v385 = vld [vmem:[%s369 + $0x68] sm:$0xff]
                  %386 = vst [vmem:[%s370 + $0x38] sm:$0xff] %v385
                  %v387 = vld [vmem:[%s369 + $0x80] sm:$0xff]
                  %388 = vst [vmem:[%s370 + $0x40] sm:$0xff] %v387
                  %v389 = vld [vmem:[%s369 + $0x88] sm:$0xff]
                  %390 = vst [vmem:[%s370 + $0x48] sm:$0xff] %v389
                  %v391 = vld [vmem:[%s369 + $0xa0] sm:$0xff]
                  %392 = vst [vmem:[%s370 + $0x50] sm:$0xff] %v391
                  %v393 = vld [vmem:[%s369 + $0xa8] sm:$0xff]
                  %394 = vst [vmem:[%s370 + $0x58] sm:$0xff] %v393
                  %v395 = vld [vmem:[%s369 + $0xc0] sm:$0xff]
                  %396 = vst [vmem:[%s370 + $0x60] sm:$0xff] %v395
                  %v397 = vld [vmem:[%s369 + $0xc8] sm:$0xff]
                  %398 = vst [vmem:[%s370 + $0x68] sm:$0xff] %v397
                  %v399 = vld [vmem:[%s369 + $0xe0] sm:$0xff]
                  %400 = vst [vmem:[%s370 + $0x70] sm:$0xff] %v399
                  %v401 = vld [vmem:[%s369 + $0xe8] sm:$0xff]
                  %402 = vst [vmem:[%s370 + $0x78] sm:$0xff] %v401
                $region84: #{hier_att_net.2} parent=78 // loop_footer
                  %s368 = sadd.s32 1, %s364
                $region85: #{hier_att_net.2} parent=78 // loop_footer_branch
                  %363 = sbr.rel target = $region81
                $region86: #{hier_att_net.2} parent=78 // loop_exit
                  _
              $region79: #{hier_att_net.2} parent=63 // pred_fallthru
                _
              // Predicated region
              $region87: #{hier_att_net.2} parent=63 // pred_check
                _
              $region88: #{hier_att_net.2} parent=63 // pred_check_branch
                %404 = sbr.rel target = $region90
              $region89: #{hier_att_net.2} parent=63 // pred_region
                _
              $region90: #{hier_att_net.2} parent=63 // pred_fallthru
                _
            $region64: #{hier_att_net.2} parent=59 // pred_fallthru
              _
            // Predicated region
            $region65: #{hier_att_net.2} parent=59 // pred_check
              _
            $region66: #{hier_att_net.2} parent=59 // pred_check_branch
              %318 = sbr.rel target = $region68
            $region67: #{hier_att_net.2} parent=59 // pred_region
              %s320 = ssub.s32 256, 1
              loop: start=0, step=1, limit=1
              $region69: #{hier_att_net.2} parent=67 // loop_pre_header
                _
              $region70: #{hier_att_net.2} parent=67 // loop_header
                %s322 = sphi 0, %s326
                %p323 = scmp.ge.s32.totalorder %s322, 1
                %s327 = sphi %s312, %s312
                %s328 = sphi %s309, %s309
              $region71: #{hier_att_net.2} parent=67 // loop_header_branch
                %325 = sbr.rel (%p323) target = $region75
              $region72: #{hier_att_net.2} parent=67 // loop_body
                %v329 = vld [vmem:[%s327] sm:%s320]
                %330 = vst [vmem:[%s328] sm:%s320] %v329
                %v331 = vld [vmem:[%s327 + $0x8] sm:%s320]
                %332 = vst [vmem:[%s328 + $0x8] sm:%s320] %v331
                %v333 = vld [vmem:[%s327 + $0x20] sm:%s320]
                %334 = vst [vmem:[%s328 + $0x10] sm:%s320] %v333
                %v335 = vld [vmem:[%s327 + $0x28] sm:%s320]
                %336 = vst [vmem:[%s328 + $0x18] sm:%s320] %v335
                %v337 = vld [vmem:[%s327 + $0x40] sm:%s320]
                %338 = vst [vmem:[%s328 + $0x20] sm:%s320] %v337
                %v339 = vld [vmem:[%s327 + $0x48] sm:%s320]
                %340 = vst [vmem:[%s328 + $0x28] sm:%s320] %v339
                %v341 = vld [vmem:[%s327 + $0x60] sm:%s320]
                %342 = vst [vmem:[%s328 + $0x30] sm:%s320] %v341
                %v343 = vld [vmem:[%s327 + $0x68] sm:%s320]
                %344 = vst [vmem:[%s328 + $0x38] sm:%s320] %v343
                %v345 = vld [vmem:[%s327 + $0x80] sm:%s320]
                %346 = vst [vmem:[%s328 + $0x40] sm:%s320] %v345
                %v347 = vld [vmem:[%s327 + $0x88] sm:%s320]
                %348 = vst [vmem:[%s328 + $0x48] sm:%s320] %v347
                %v349 = vld [vmem:[%s327 + $0xa0] sm:%s320]
                %350 = vst [vmem:[%s328 + $0x50] sm:%s320] %v349
                %v351 = vld [vmem:[%s327 + $0xa8] sm:%s320]
                %352 = vst [vmem:[%s328 + $0x58] sm:%s320] %v351
                %v353 = vld [vmem:[%s327 + $0xc0] sm:%s320]
                %354 = vst [vmem:[%s328 + $0x60] sm:%s320] %v353
                %v355 = vld [vmem:[%s327 + $0xc8] sm:%s320]
                %356 = vst [vmem:[%s328 + $0x68] sm:%s320] %v355
                %v357 = vld [vmem:[%s327 + $0xe0] sm:%s320]
                %358 = vst [vmem:[%s328 + $0x70] sm:%s320] %v357
                %v359 = vld [vmem:[%s327 + $0xe8] sm:%s320]
                %360 = vst [vmem:[%s328 + $0x78] sm:%s320] %v359
              $region73: #{hier_att_net.2} parent=67 // loop_footer
                %s326 = sadd.s32 1, %s322
              $region74: #{hier_att_net.2} parent=67 // loop_footer_branch
                %321 = sbr.rel target = $region70
              $region75: #{hier_att_net.2} parent=67 // loop_exit
                _
            $region68: #{hier_att_net.2} parent=59 // pred_fallthru
              _
          $region60: #{hier_att_net.2} parent=55 // pred_fallthru
            _
          %405 = vnop
        $region56: #{hier_att_net.2} parent=51 // pred_fallthru
          _
      $region52: #{hier_att_net.2} parent=5 // pred_fallthru
        _
      %p406 = scmp.le.s32.totalorder 1, %s16
      %p407 = scmp.lt.s32.totalorder %s16, 3
      %p408 = pnand %p406, %p407
      %p409 = pneg %p408
      // Predicated region
      $region91: #{hier_att_net.2} parent=5 // pred_check
        _
      $region92: #{hier_att_net.2} parent=5 // pred_check_branch
        %411 = sbr.rel (%p408) target = $region94
      $region93: #{hier_att_net.2} parent=5 // pred_region
        %s412 = ssub.s32 %s16, 1
        %s413 = sand.u32 %s29, 1
        %s414 = sand.u32 %s29, 1
        %s415 = smul.addr %s414, 128
        %s416 = scalar_lea.vmem [#allocation5], %s415
        // Predicated region
        $region95: #{hier_att_net.2} parent=93 // pred_check
          %p417 = pneg %p42
        $region96: #{hier_att_net.2} parent=93 // pred_check_branch
          %419 = sbr.rel (%p417) target = $region98
        $region97: #{hier_att_net.2} parent=93 // pred_region
          _
        $region98: #{hier_att_net.2} parent=93 // pred_fallthru
          _
        %s420 = sand.u32 %s29, 1
        %s421 = sand.u32 %s29, 1
        %s422 = smul.addr %s421, 128
        %s423 = scalar_lea.vmem [#allocation5], %s422
        %p424 = pneg %p42
        %p425 = pneg %p39
        %p426 = pneg %p63
        %p427 = pneg %p60
        %p428 = pneg %p84
        %p429 = pneg %p81
        %p430 = pneg %p105
        %p431 = pneg %p102
        %p432 = pneg %p126
        %p433 = pneg %p123
        %p434 = pneg %p147
        %p435 = pneg %p144
        %p436 = pneg %p168
        %p437 = pneg %p165
        %p438 = pneg %p189
        %p439 = pneg %p186
        %p440 = pneg %p210
        %p441 = pneg %p207
        %p442 = pneg %p231
        %p443 = pneg %p228
        %p444 = pneg %p257
        %p445 = pneg %p254
        %s446 = smul.u32 2, %s21
        %p447 = scmp.lt.s32.totalorder %s446, 3
        %s448 = scalar_select %p447, %s446, 3
        %s449 = smul.addr %s448, 8
        %s450 = scalar_lea.vmem %s10, %s449
        %s451 = smul.u32 2, %s21
        %s452 = smul.u32 2, %s21
        %p453 = scmp.lt.s32.totalorder %s452, 3
        %s454 = scalar_select %p453, %s452, 3
        %s455 = smul.addr %s454, 8
        %s456 = scalar_lea.vmem %s10, %s455
        %s457 = smul.u32 2, %s21
        %v458 = vld [vmem:[%s416] sm:$0xff]
        %v459 = vld [vmem:[%s416 + $0x8] sm:$0xff]
        %v460 = vld [vmem:[%s416 + $0x10] sm:$0xff]
        %v461 = vld [vmem:[%s416 + $0x18] sm:$0xff]
        %v462 = vld [vmem:[%s416 + $0x20] sm:$0xff]
        %v463 = vld [vmem:[%s416 + $0x28] sm:$0xff]
        %v464 = vld [vmem:[%s416 + $0x30] sm:$0xff]
        %v465 = vld [vmem:[%s416 + $0x38] sm:$0xff]
        %v466 = vld [vmem:[%s416 + $0x40] sm:$0xff]
        %v467 = vld [vmem:[%s416 + $0x48] sm:$0xff]
        %v468 = vld [vmem:[%s416 + $0x50] sm:$0xff]
        %v469 = vld [vmem:[%s416 + $0x58] sm:$0xff]
        %v470 = vld [vmem:[%s416 + $0x60] sm:$0xff]
        %v471 = vld [vmem:[%s416 + $0x68] sm:$0xff]
        %v472 = vld [vmem:[%s416 + $0x70] sm:$0xff]
        %v473 = vld [vmem:[%s416 + $0x78] sm:$0xff]
        %v474 = vld [vmem:[%s1] sm:$0xff]
        %v475 = vld [vmem:[%s1 + $0x8] sm:$0xff]
        %v476 = vld [vmem:[%s1 + $0x10] sm:$0xff]
        %v477 = vld [vmem:[%s1 + $0x18] sm:$0xff]
        %v478 = vld [vmem:[%s2] sm:$0x1]
        %v480 = vperm.slane %v478, 0
        %vm482 = vcmask 261120
        %v484 = vsel %vm482, %v458, 0
        %v487 = vsel %vm482, %v459, 0
        %v490 = vsel %vm482, %v460, 0
        %v493 = vsel %vm482, %v461, 0
        %v496 = vsel %vm482, %v462, 0
        %v499 = vsel %vm482, %v463, 0
        %v502 = vsel %vm482, %v464, 0
        %v505 = vsel %vm482, %v465, 0
        %v508 = vsel %vm482, %v466, 0
        %v511 = vsel %vm482, %v467, 0
        %v514 = vsel %vm482, %v468, 0
        %v517 = vsel %vm482, %v469, 0
        %v520 = vsel %vm482, %v470, 0
        %v523 = vsel %vm482, %v471, 0
        %v526 = vsel %vm482, %v472, 0
        %v529 = vsel %vm482, %v473, 0
        %531 = vmatpush.msra.mxu0 0.0
        %532 = vmatpush.msra.mxu0 0.0
        %533 = vmatpush.msra.mxu0 0.0
        %534 = vmatpush.msra.mxu0 0.0
        %535 = vmatpush.msra.mxu0 0.0
        %536 = vmatpush.msra.mxu0 0.0
        %537 = vmatpush.msra.mxu0 0.0
        %538 = vmatpush.msra.mxu0 0.0
        %539 = vmatpush.msra.mxu0 0.0
        %540 = vmatpush.msra.mxu0 0.0
        %541 = vmatpush.msra.mxu0 0.0
        %542 = vmatpush.msra.mxu0 0.0
        %543 = vmatpush.msra.mxu0 %v477
        %544 = vmatpush.msra.mxu0 %v476
        %545 = vmatpush.msra.mxu0 %v475
        %546 = vmatpush.msra.mxu0 %v474
        %547 = vmatmul.f32.gmra.mxu0 %v484
        %v548 = vpop.f32.mrf.mxu0
        %v549 = vadd.f32 %v480, %v548
        %550 = vmatmul.f32.gmra.mxu0 %v487
        %v551 = vpop.f32.mrf.mxu0
        %v552 = vadd.f32 %v480, %v551
        %553 = vmatmul.f32.gmra.mxu0 %v490
        %v554 = vpop.f32.mrf.mxu0
        %v555 = vadd.f32 %v480, %v554
        %556 = vmatmul.f32.gmra.mxu0 %v493
        %v557 = vpop.f32.mrf.mxu0
        %v558 = vadd.f32 %v480, %v557
        %559 = vmatmul.f32.gmra.mxu0 %v496
        %v560 = vpop.f32.mrf.mxu0
        %v561 = vadd.f32 %v480, %v560
        %562 = vmatmul.f32.gmra.mxu0 %v499
        %v563 = vpop.f32.mrf.mxu0
        %v564 = vadd.f32 %v480, %v563
        %565 = vmatmul.f32.gmra.mxu0 %v502
        %v566 = vpop.f32.mrf.mxu0
        %v567 = vadd.f32 %v480, %v566
        %568 = vmatmul.f32.gmra.mxu0 %v505
        %v569 = vpop.f32.mrf.mxu0
        %v570 = vadd.f32 %v480, %v569
        %571 = vmatmul.f32.gmra.mxu0 %v508
        %v572 = vpop.f32.mrf.mxu0
        %v573 = vadd.f32 %v480, %v572
        %574 = vmatmul.f32.gmra.mxu0 %v511
        %v575 = vpop.f32.mrf.mxu0
        %v576 = vadd.f32 %v480, %v575
        %577 = vmatmul.f32.gmra.mxu0 %v514
        %v578 = vpop.f32.mrf.mxu0
        %v579 = vadd.f32 %v480, %v578
        %580 = vmatmul.f32.gmra.mxu0 %v517
        %v581 = vpop.f32.mrf.mxu0
        %v582 = vadd.f32 %v480, %v581
        %583 = vmatmul.f32.gmra.mxu0 %v520
        %v584 = vpop.f32.mrf.mxu0
        %v585 = vadd.f32 %v480, %v584
        %586 = vmatmul.f32.gmra.mxu0 %v523
        %v587 = vpop.f32.mrf.mxu0
        %v588 = vadd.f32 %v480, %v587
        %589 = vmatmul.f32.gmra.mxu0 %v526
        %v590 = vpop.f32.mrf.mxu0
        %v591 = vadd.f32 %v480, %v590
        %592 = vmatmul.f32.gmra.mxu0 %v529
        %v593 = vpop.f32.mrf.mxu0
        %v594 = vadd.f32 %v480, %v593
        %595 = vdwg.mxu0
        %vm596 = vcmask 785408
        %597 = vst.msk [vmem:[#allocation2] sm:$0xff] %vm596, %v549
        %598 = vst.msk [vmem:[#allocation2 + $0x8] sm:$0xff] %vm596, %v552
        %599 = vst.msk [vmem:[#allocation2 + $0x10] sm:$0xff] %vm596, %v555
        %600 = vst.msk [vmem:[#allocation2 + $0x18] sm:$0xff] %vm596, %v558
        %601 = vst.msk [vmem:[#allocation2 + $0x20] sm:$0xff] %vm596, %v561
        %602 = vst.msk [vmem:[#allocation2 + $0x28] sm:$0xff] %vm596, %v564
        %603 = vst.msk [vmem:[#allocation2 + $0x30] sm:$0xff] %vm596, %v567
        %604 = vst.msk [vmem:[#allocation2 + $0x38] sm:$0xff] %vm596, %v570
        %605 = vst.msk [vmem:[#allocation2 + $0x40] sm:$0xff] %vm596, %v573
        %606 = vst.msk [vmem:[#allocation2 + $0x48] sm:$0xff] %vm596, %v576
        %607 = vst.msk [vmem:[#allocation2 + $0x50] sm:$0xff] %vm596, %v579
        %608 = vst.msk [vmem:[#allocation2 + $0x58] sm:$0xff] %vm596, %v582
        %609 = vst.msk [vmem:[#allocation2 + $0x60] sm:$0xff] %vm596, %v585
        %610 = vst.msk [vmem:[#allocation2 + $0x68] sm:$0xff] %vm596, %v588
        %611 = vst.msk [vmem:[#allocation2 + $0x70] sm:$0xff] %vm596, %v591
        %612 = vst.msk [vmem:[#allocation2 + $0x78] sm:$0xff] %vm596, %v594
        %v613 = vld [vmem:[%s3] sm:$0xff]
        %v614 = vld [vmem:[%s3 + $0x8] sm:$0xff]
        %v615 = vld [vmem:[%s4] sm:$0x1]
        %v616 = vld [vmem:[%s5] sm:$0xff]
        %v617 = vld [vmem:[%s5 + $0x8] sm:$0xff]
        %v618 = vld [vmem:[%s6] sm:$0x1]
        %v619 = vld [vmem:[%s7] sm:$0xff]
        %v620 = vld [vmem:[%s7 + $0x8] sm:$0xff]
        %v621 = vld [vmem:[%s7 + $0x10] sm:$0xff]
        %v622 = vld [vmem:[%s7 + $0x18] sm:$0xff]
        %v623 = vld [vmem:[%s8] sm:$0x1]
        %v624 = vld [vmem:[%s9] sm:$0x1]
        loop: start=0, step=1, limit=8
        $region99: #{hier_att_net.2} parent=93 // loop_pre_header
          _
        $region100: #{hier_att_net.2} parent=93 // loop_header
          %s626 = sphi 0, %s630
          %p627 = scmp.ge.s32.totalorder %s626, 8
          %v631 = vphi 0.0, %v793
          %v632 = vphi 0.0, %v794
          %v633 = vphi 0.0, %v877
          %v634 = vphi 0.0, %v878
        $region101: #{hier_att_net.2} parent=93 // loop_header_branch
          %629 = sbr.rel (%p627) target = $region105
        $region102: #{hier_att_net.2} parent=93 // loop_body
          %s635 = ssub.s32 7, %s626
          %s636 = smul.u32 %s626, 16
          %s637 = scalar_lea.vmem [#allocation2], %s636
          %v638 = vld [vmem:[%s637] sm:$0xff]
          %v639 = vld [vmem:[%s637 + $0x8] sm:$0xff]
          %s640 = smul.u32 %s635, 16
          %s641 = scalar_lea.vmem [#allocation2], %s640
          %v642 = vld [vmem:[%s641] sm:$0xff]
          %v643 = vld [vmem:[%s641 + $0x8] sm:$0xff]
          %v645 = vperm.slane %v615, 0
          %649 = vrot.lane.b32.xlu0 %v631, 112
          %v650 = vpop.permute.xlu0 %649
          %651 = vrot.lane.b32.xlu0 %v632, 112
          %v652 = vpop.permute.xlu0 %651
          %vm653 = vcmask 130048
          %v654 = vsel %vm653, %v650, 0
          %v656 = vsel %vm653, %v652, 0
          %658 = vmatpush.msra.mxu0 0.0
          %659 = vmatpush.msra.mxu0 0.0
          %660 = vmatpush.msra.mxu0 0.0
          %661 = vmatpush.msra.mxu0 0.0
          %662 = vmatpush.msra.mxu0 0.0
          %663 = vmatpush.msra.mxu0 0.0
          %664 = vmatpush.msra.mxu0 0.0
          %665 = vmatpush.msra.mxu0 0.0
          %666 = vmatpush.msra.mxu0 0.0
          %667 = vmatpush.msra.mxu0 0.0
          %668 = vmatpush.msra.mxu0 0.0
          %669 = vmatpush.msra.mxu0 0.0
          %670 = vmatpush.msra.mxu0 0.0
          %671 = vmatpush.msra.mxu0 0.0
          %672 = vmatpush.msra.mxu0 %v614
          %673 = vmatpush.msra.mxu0 %v613
          %674 = vmatmul.f32.gmra.mxu0 %v654
          %v675 = vpop.f32.mrf.mxu0
          %v676 = vadd.f32 %v645, %v675
          %677 = vmatmul.f32.gmra.mxu0 %v656
          %v678 = vpop.f32.mrf.mxu0
          %v679 = vadd.f32 %v645, %v678
          %680 = vdwg.mxu0
          %v682 = vperm.slane %v618, 0
          %686 = vrot.lane.b32.xlu0 %v633, 64
          %v687 = vpop.permute.xlu0 %686
          %688 = vrot.lane.b32.xlu0 %v634, 64
          %v689 = vpop.permute.xlu0 %688
          %v690 = vsel %vm653, %v687, 0
          %v692 = vsel %vm653, %v689, 0
          %694 = vmatpush.msra.mxu0 0.0
          %695 = vmatpush.msra.mxu0 0.0
          %696 = vmatpush.msra.mxu0 0.0
          %697 = vmatpush.msra.mxu0 0.0
          %698 = vmatpush.msra.mxu0 0.0
          %699 = vmatpush.msra.mxu0 0.0
          %700 = vmatpush.msra.mxu0 0.0
          %701 = vmatpush.msra.mxu0 0.0
          %702 = vmatpush.msra.mxu0 0.0
          %703 = vmatpush.msra.mxu0 0.0
          %704 = vmatpush.msra.mxu0 0.0
          %705 = vmatpush.msra.mxu0 0.0
          %706 = vmatpush.msra.mxu0 0.0
          %707 = vmatpush.msra.mxu0 0.0
          %708 = vmatpush.msra.mxu0 %v617
          %709 = vmatpush.msra.mxu0 %v616
          %710 = vmatmul.f32.gmra.mxu0 %v690
          %v711 = vpop.f32.mrf.mxu0
          %v712 = vadd.f32 %v682, %v711
          %713 = vmatmul.f32.gmra.mxu0 %v692
          %v714 = vpop.f32.mrf.mxu0
          %v715 = vadd.f32 %v682, %v714
          %716 = vdwg.mxu0
          %v717 = vadd.f32 %v638, %v676
          %v718 = vadd.f32 %v639, %v679
          %v719 = vxor.u32 %v717, 2147483648
          %v720 = vxor.u32 %v718, 2147483648
          %v721 = vmul.f32 %v719, 1.442695
          %v722 = vpow.pop %v721
          %v723 = vmul.f32 %v720, 1.442695
          %v724 = vpow.pop %v723
          %v725 = vadd.f32 %v722, 1.0
          %v726 = vadd.f32 %v724, 1.0
          %v727 = vrcp.pop %v725
          %v728 = vmul.f32 %v725, %v727
          %v729 = vsub.f32 1.0, %v728
          %v730 = vmul.f32 %v727, %v729
          %v731 = vadd.f32 %v727, %v730
          %vm732 = vweird.f32 %v725
          %vm733 = vweird.f32 %v727
          %vm734 = vmor %vm732, %vm733
          %v735 = vsel %vm734, %v727, %v731
          %v736 = vand.u32 2147483647, %v725
          %vm737 = vcmp.eq.f32.partialorder %v736, 8.507059e+37
          %v738 = vand.u32 %v725, 2147483648
          %v739 = vor.u32 1.1754944e-38, %v738
          %v740 = vsel %vm737, %v739, %v735
          %v741 = vmul.f32 1.0, %v740
          %v742 = vrcp.pop %v726
          %v743 = vmul.f32 %v726, %v742
          %v744 = vsub.f32 1.0, %v743
          %v745 = vmul.f32 %v742, %v744
          %v746 = vadd.f32 %v742, %v745
          %vm747 = vweird.f32 %v726
          %vm748 = vweird.f32 %v742
          %vm749 = vmor %vm747, %vm748
          %v750 = vsel %vm749, %v742, %v746
          %v751 = vand.u32 2147483647, %v726
          %vm752 = vcmp.eq.f32.partialorder %v751, 8.507059e+37
          %v753 = vand.u32 %v726, 2147483648
          %v754 = vor.u32 1.1754944e-38, %v753
          %v755 = vsel %vm752, %v754, %v750
          %v756 = vmul.f32 1.0, %v755
          %759 = vrot.lane.b32.xlu0 %v676, 96
          %v760 = vpop.permute.xlu0 %759
          %761 = vrot.lane.b32.xlu0 %v679, 96
          %v762 = vpop.permute.xlu0 %761
          %v765 = vmul.f32 %v741, %v760
          %v766 = vmul.f32 %v756, %v762
          %769 = vrot.lane.b32.xlu0 %v765, 32
          %v770 = vpop.permute.xlu0 %769
          %771 = vrot.lane.b32.xlu0 %v766, 32
          %v772 = vpop.permute.xlu0 %771
          %v775 = vadd.f32 %v638, %v770
          %v776 = vadd.f32 %v639, %v772
          %v777 = vtanh.pop %v775
          %v778 = vtanh.pop %v776
          %v779 = vsub.f32 1.0, %v741
          %v780 = vsub.f32 1.0, %v756
          %783 = vrot.lane.b32.xlu0 %v777, 112
          %v784 = vpop.permute.xlu0 %783
          %785 = vrot.lane.b32.xlu0 %v778, 112
          %v786 = vpop.permute.xlu0 %785
          %v789 = vmul.f32 %v779, %v784
          %v790 = vmul.f32 %v780, %v786
          %v791 = vmul.f32 %v741, %v631
          %v792 = vmul.f32 %v756, %v632
          %v793 = vadd.f32 %v789, %v791
          %v794 = vadd.f32 %v790, %v792
          %797 = vrot.lane.b32.xlu0 %v712, 48
          %v798 = vpop.permute.xlu0 %797
          %799 = vrot.lane.b32.xlu0 %v715, 48
          %v800 = vpop.permute.xlu0 %799
          %v803 = vadd.f32 %v642, %v798
          %v804 = vadd.f32 %v643, %v800
          %v805 = vxor.u32 %v803, 2147483648
          %v806 = vxor.u32 %v804, 2147483648
          %v807 = vmul.f32 %v805, 1.442695
          %v808 = vpow.pop %v807
          %v809 = vmul.f32 %v806, 1.442695
          %v810 = vpow.pop %v809
          %v811 = vadd.f32 %v808, 1.0
          %v812 = vadd.f32 %v810, 1.0
          %v813 = vrcp.pop %v811
          %v814 = vmul.f32 %v811, %v813
          %v815 = vsub.f32 1.0, %v814
          %v816 = vmul.f32 %v813, %v815
          %v817 = vadd.f32 %v813, %v816
          %vm818 = vweird.f32 %v811
          %vm819 = vweird.f32 %v813
          %vm820 = vmor %vm818, %vm819
          %v821 = vsel %vm820, %v813, %v817
          %v822 = vand.u32 2147483647, %v811
          %vm823 = vcmp.eq.f32.partialorder %v822, 8.507059e+37
          %v824 = vand.u32 %v811, 2147483648
          %v825 = vor.u32 1.1754944e-38, %v824
          %v826 = vsel %vm823, %v825, %v821
          %v827 = vmul.f32 1.0, %v826
          %v828 = vrcp.pop %v812
          %v829 = vmul.f32 %v812, %v828
          %v830 = vsub.f32 1.0, %v829
          %v831 = vmul.f32 %v828, %v830
          %v832 = vadd.f32 %v828, %v831
          %vm833 = vweird.f32 %v812
          %vm834 = vweird.f32 %v828
          %vm835 = vmor %vm833, %vm834
          %v836 = vsel %vm835, %v828, %v832
          %v837 = vand.u32 2147483647, %v812
          %vm838 = vcmp.eq.f32.partialorder %v837, 8.507059e+37
          %v839 = vand.u32 %v812, 2147483648
          %v840 = vor.u32 1.1754944e-38, %v839
          %v841 = vsel %vm838, %v840, %v836
          %v842 = vmul.f32 1.0, %v841
          %843 = vrot.lane.b32.xlu0 %v712, 16
          %v844 = vpop.permute.xlu0 %843
          %845 = vrot.lane.b32.xlu0 %v715, 16
          %v846 = vpop.permute.xlu0 %845
          %v849 = vmul.f32 %v827, %v844
          %v850 = vmul.f32 %v842, %v846
          %853 = vrot.lane.b32.xlu0 %v849, 32
          %v854 = vpop.permute.xlu0 %853
          %855 = vrot.lane.b32.xlu0 %v850, 32
          %v856 = vpop.permute.xlu0 %855
          %v859 = vadd.f32 %v642, %v854
          %v860 = vadd.f32 %v643, %v856
          %v861 = vtanh.pop %v859
          %v862 = vtanh.pop %v860
          %v863 = vsub.f32 1.0, %v827
          %v864 = vsub.f32 1.0, %v842
          %867 = vrot.lane.b32.xlu0 %v861, 112
          %v868 = vpop.permute.xlu0 %867
          %869 = vrot.lane.b32.xlu0 %v862, 112
          %v870 = vpop.permute.xlu0 %869
          %v873 = vmul.f32 %v863, %v868
          %v874 = vmul.f32 %v864, %v870
          %v875 = vmul.f32 %v827, %v633
          %v876 = vmul.f32 %v842, %v634
          %v877 = vadd.f32 %v873, %v875
          %v878 = vadd.f32 %v874, %v876
          %881 = vrot.lane.b32.xlu0 %v793, 112
          %v882 = vpop.permute.xlu0 %881
          %883 = vrot.lane.b32.xlu0 %v794, 112
          %v884 = vpop.permute.xlu0 %883
          %s887 = scalar_lea.vmem [#allocation3], %s636
          %888 = vst.msk [vmem:[%s887] sm:$0xff] %vm653, %v882
          %889 = vst.msk [vmem:[%s887 + $0x8] sm:$0xff] %vm653, %v884
          %892 = vrot.lane.b32.xlu0 %v877, 64
          %v893 = vpop.permute.xlu0 %892
          %894 = vrot.lane.b32.xlu0 %v878, 64
          %v895 = vpop.permute.xlu0 %894
          %s898 = scalar_lea.vmem [#allocation4], %s640
          %899 = vst.msk [vmem:[%s898] sm:$0xff] %vm653, %v893
          %900 = vst.msk [vmem:[%s898 + $0x8] sm:$0xff] %vm653, %v895
        $region103: #{hier_att_net.2} parent=93 // loop_footer
          %s630 = sadd.s32 1, %s626
        $region104: #{hier_att_net.2} parent=93 // loop_footer_branch
          %625 = sbr.rel target = $region100
        $region105: #{hier_att_net.2} parent=93 // loop_exit
          _
        %v901 = vld [vmem:[#allocation3] sm:$0xff]
        %v902 = vld [vmem:[#allocation3 + $0x8] sm:$0xff]
        %v903 = vld [vmem:[#allocation3 + $0x10] sm:$0xff]
        %v904 = vld [vmem:[#allocation3 + $0x18] sm:$0xff]
        %v905 = vld [vmem:[#allocation3 + $0x20] sm:$0xff]
        %v906 = vld [vmem:[#allocation3 + $0x28] sm:$0xff]
        %v907 = vld [vmem:[#allocation3 + $0x30] sm:$0xff]
        %v908 = vld [vmem:[#allocation3 + $0x38] sm:$0xff]
        %v909 = vld [vmem:[#allocation3 + $0x40] sm:$0xff]
        %v910 = vld [vmem:[#allocation3 + $0x48] sm:$0xff]
        %v911 = vld [vmem:[#allocation3 + $0x50] sm:$0xff]
        %v912 = vld [vmem:[#allocation3 + $0x58] sm:$0xff]
        %v913 = vld [vmem:[#allocation3 + $0x60] sm:$0xff]
        %v914 = vld [vmem:[#allocation3 + $0x68] sm:$0xff]
        %v915 = vld [vmem:[#allocation3 + $0x70] sm:$0xff]
        %v916 = vld [vmem:[#allocation3 + $0x78] sm:$0xff]
        %v917 = vld [vmem:[#allocation4] sm:$0xff]
        %v918 = vld [vmem:[#allocation4 + $0x8] sm:$0xff]
        %v919 = vld [vmem:[#allocation4 + $0x10] sm:$0xff]
        %v920 = vld [vmem:[#allocation4 + $0x18] sm:$0xff]
        %v921 = vld [vmem:[#allocation4 + $0x20] sm:$0xff]
        %v922 = vld [vmem:[#allocation4 + $0x28] sm:$0xff]
        %v923 = vld [vmem:[#allocation4 + $0x30] sm:$0xff]
        %v924 = vld [vmem:[#allocation4 + $0x38] sm:$0xff]
        %v925 = vld [vmem:[#allocation4 + $0x40] sm:$0xff]
        %v926 = vld [vmem:[#allocation4 + $0x48] sm:$0xff]
        %v927 = vld [vmem:[#allocation4 + $0x50] sm:$0xff]
        %v928 = vld [vmem:[#allocation4 + $0x58] sm:$0xff]
        %v929 = vld [vmem:[#allocation4 + $0x60] sm:$0xff]
        %v930 = vld [vmem:[#allocation4 + $0x68] sm:$0xff]
        %v931 = vld [vmem:[#allocation4 + $0x70] sm:$0xff]
        %v932 = vld [vmem:[#allocation4 + $0x78] sm:$0xff]
        %949 = vrot.lane.b32.xlu0 %v917, 16
        %v950 = vpop.permute.xlu0 %949
        %951 = vrot.lane.b32.xlu0 %v918, 16
        %v952 = vpop.permute.xlu0 %951
        %953 = vrot.lane.b32.xlu0 %v919, 16
        %v954 = vpop.permute.xlu0 %953
        %955 = vrot.lane.b32.xlu0 %v920, 16
        %v956 = vpop.permute.xlu0 %955
        %957 = vrot.lane.b32.xlu0 %v921, 16
        %v958 = vpop.permute.xlu0 %957
        %959 = vrot.lane.b32.xlu0 %v922, 16
        %v960 = vpop.permute.xlu0 %959
        %961 = vrot.lane.b32.xlu0 %v923, 16
        %v962 = vpop.permute.xlu0 %961
        %963 = vrot.lane.b32.xlu0 %v924, 16
        %v964 = vpop.permute.xlu0 %963
        %965 = vrot.lane.b32.xlu0 %v925, 16
        %v966 = vpop.permute.xlu0 %965
        %967 = vrot.lane.b32.xlu0 %v926, 16
        %v968 = vpop.permute.xlu0 %967
        %969 = vrot.lane.b32.xlu0 %v927, 16
        %v970 = vpop.permute.xlu0 %969
        %971 = vrot.lane.b32.xlu0 %v928, 16
        %v972 = vpop.permute.xlu0 %971
        %973 = vrot.lane.b32.xlu0 %v929, 16
        %v974 = vpop.permute.xlu0 %973
        %975 = vrot.lane.b32.xlu0 %v930, 16
        %v976 = vpop.permute.xlu0 %975
        %977 = vrot.lane.b32.xlu0 %v931, 16
        %v978 = vpop.permute.xlu0 %977
        %979 = vrot.lane.b32.xlu0 %v932, 16
        %v980 = vpop.permute.xlu0 %979
        %vm997 = vcmask 130048
        %v998 = vsel %vm997, %v901, %v950
        %v999 = vsel %vm997, %v902, %v952
        %v1000 = vsel %vm997, %v903, %v954
        %v1001 = vsel %vm997, %v904, %v956
        %v1002 = vsel %vm997, %v905, %v958
        %v1003 = vsel %vm997, %v906, %v960
        %v1004 = vsel %vm997, %v907, %v962
        %v1005 = vsel %vm997, %v908, %v964
        %v1006 = vsel %vm997, %v909, %v966
        %v1007 = vsel %vm997, %v910, %v968
        %v1008 = vsel %vm997, %v911, %v970
        %v1009 = vsel %vm997, %v912, %v972
        %v1010 = vsel %vm997, %v913, %v974
        %v1011 = vsel %vm997, %v914, %v976
        %v1012 = vsel %vm997, %v915, %v978
        %v1013 = vsel %vm997, %v916, %v980
        %v1015 = vperm.slane %v623, 0
        %v1018 = vsel %vm482, %v998, 0
        %v1021 = vsel %vm482, %v999, 0
        %v1024 = vsel %vm482, %v1000, 0
        %v1027 = vsel %vm482, %v1001, 0
        %v1030 = vsel %vm482, %v1002, 0
        %v1033 = vsel %vm482, %v1003, 0
        %v1036 = vsel %vm482, %v1004, 0
        %v1039 = vsel %vm482, %v1005, 0
        %v1042 = vsel %vm482, %v1006, 0
        %v1045 = vsel %vm482, %v1007, 0
        %v1048 = vsel %vm482, %v1008, 0
        %v1051 = vsel %vm482, %v1009, 0
        %v1054 = vsel %vm482, %v1010, 0
        %v1057 = vsel %vm482, %v1011, 0
        %v1060 = vsel %vm482, %v1012, 0
        %v1063 = vsel %vm482, %v1013, 0
        %1065 = vmatpush.msra.mxu0 0.0
        %1066 = vmatpush.msra.mxu0 0.0
        %1067 = vmatpush.msra.mxu0 0.0
        %1068 = vmatpush.msra.mxu0 0.0
        %1069 = vmatpush.msra.mxu0 0.0
        %1070 = vmatpush.msra.mxu0 0.0
        %1071 = vmatpush.msra.mxu0 0.0
        %1072 = vmatpush.msra.mxu0 0.0
        %1073 = vmatpush.msra.mxu0 0.0
        %1074 = vmatpush.msra.mxu0 0.0
        %1075 = vmatpush.msra.mxu0 0.0
        %1076 = vmatpush.msra.mxu0 0.0
        %1077 = vmatpush.msra.mxu0 %v622
        %1078 = vmatpush.msra.mxu0 %v621
        %1079 = vmatpush.msra.mxu0 %v620
        %1080 = vmatpush.msra.mxu0 %v619
        %1081 = vmatmul.f32.gmra.mxu0 %v1018
        %v1082 = vpop.f32.mrf.mxu0
        %v1083 = vadd.f32 %v1015, %v1082
        %1084 = vmatmul.f32.gmra.mxu0 %v1021
        %v1085 = vpop.f32.mrf.mxu0
        %v1086 = vadd.f32 %v1015, %v1085
        %1087 = vmatmul.f32.gmra.mxu0 %v1024
        %v1088 = vpop.f32.mrf.mxu0
        %v1089 = vadd.f32 %v1015, %v1088
        %1090 = vmatmul.f32.gmra.mxu0 %v1027
        %v1091 = vpop.f32.mrf.mxu0
        %v1092 = vadd.f32 %v1015, %v1091
        %1093 = vmatmul.f32.gmra.mxu0 %v1030
        %v1094 = vpop.f32.mrf.mxu0
        %v1095 = vadd.f32 %v1015, %v1094
        %1096 = vmatmul.f32.gmra.mxu0 %v1033
        %v1097 = vpop.f32.mrf.mxu0
        %v1098 = vadd.f32 %v1015, %v1097
        %1099 = vmatmul.f32.gmra.mxu0 %v1036
        %v1100 = vpop.f32.mrf.mxu0
        %v1101 = vadd.f32 %v1015, %v1100
        %1102 = vmatmul.f32.gmra.mxu0 %v1039
        %v1103 = vpop.f32.mrf.mxu0
        %v1104 = vadd.f32 %v1015, %v1103
        %1105 = vmatmul.f32.gmra.mxu0 %v1042
        %v1106 = vpop.f32.mrf.mxu0
        %v1107 = vadd.f32 %v1015, %v1106
        %1108 = vmatmul.f32.gmra.mxu0 %v1045
        %v1109 = vpop.f32.mrf.mxu0
        %v1110 = vadd.f32 %v1015, %v1109
        %1111 = vmatmul.f32.gmra.mxu0 %v1048
        %v1112 = vpop.f32.mrf.mxu0
        %v1113 = vadd.f32 %v1015, %v1112
        %1114 = vmatmul.f32.gmra.mxu0 %v1051
        %v1115 = vpop.f32.mrf.mxu0
        %v1116 = vadd.f32 %v1015, %v1115
        %1117 = vmatmul.f32.gmra.mxu0 %v1054
        %v1118 = vpop.f32.mrf.mxu0
        %v1119 = vadd.f32 %v1015, %v1118
        %1120 = vmatmul.f32.gmra.mxu0 %v1057
        %v1121 = vpop.f32.mrf.mxu0
        %v1122 = vadd.f32 %v1015, %v1121
        %1123 = vmatmul.f32.gmra.mxu0 %v1060
        %v1124 = vpop.f32.mrf.mxu0
        %v1125 = vadd.f32 %v1015, %v1124
        %1126 = vmatmul.f32.gmra.mxu0 %v1063
        %v1127 = vpop.f32.mrf.mxu0
        %v1128 = vadd.f32 %v1015, %v1127
        %1129 = vdwg.mxu0
        %v1130 = vtanh.pop %v1083
        %v1131 = vtanh.pop %v1086
        %v1132 = vtanh.pop %v1089
        %v1133 = vtanh.pop %v1092
        %v1134 = vtanh.pop %v1095
        %v1135 = vtanh.pop %v1098
        %v1136 = vtanh.pop %v1101
        %v1137 = vtanh.pop %v1104
        %v1138 = vtanh.pop %v1107
        %v1139 = vtanh.pop %v1110
        %v1140 = vtanh.pop %v1113
        %v1141 = vtanh.pop %v1116
        %v1142 = vtanh.pop %v1119
        %v1143 = vtanh.pop %v1122
        %v1144 = vtanh.pop %v1125
        %v1145 = vtanh.pop %v1128
        %v1147 = vperm.slane %v624, 0
        %v1149 = vmul.f32 %v1130, %v1147
        %v1150 = vmul.f32 %v1131, %v1147
        %v1151 = vmul.f32 %v1132, %v1147
        %v1152 = vmul.f32 %v1133, %v1147
        %v1153 = vmul.f32 %v1134, %v1147
        %v1154 = vmul.f32 %v1135, %v1147
        %v1155 = vmul.f32 %v1136, %v1147
        %v1156 = vmul.f32 %v1137, %v1147
        %v1157 = vmul.f32 %v1138, %v1147
        %v1158 = vmul.f32 %v1139, %v1147
        %v1159 = vmul.f32 %v1140, %v1147
        %v1160 = vmul.f32 %v1141, %v1147
        %v1161 = vmul.f32 %v1142, %v1147
        %v1162 = vmul.f32 %v1143, %v1147
        %v1163 = vmul.f32 %v1144, %v1147
        %v1164 = vmul.f32 %v1145, %v1147
        %v1165 = vsel %vm482, %v1149, 0.0
        %1166 = vadd.xlane.f32.xlu0 %v1165
        %v1167 = vpop.xlane.xlu0 %1166
        %v1168 = vsel %vm482, %v1150, 0.0
        %1169 = vadd.xlane.f32.xlu0 %v1168
        %v1170 = vpop.xlane.xlu0 %1169
        %v1171 = vsel %vm482, %v1151, 0.0
        %1172 = vadd.xlane.f32.xlu0 %v1171
        %v1173 = vpop.xlane.xlu0 %1172
        %v1174 = vsel %vm482, %v1152, 0.0
        %1175 = vadd.xlane.f32.xlu0 %v1174
        %v1176 = vpop.xlane.xlu0 %1175
        %v1177 = vsel %vm482, %v1153, 0.0
        %1178 = vadd.xlane.f32.xlu0 %v1177
        %v1179 = vpop.xlane.xlu0 %1178
        %v1180 = vsel %vm482, %v1154, 0.0
        %1181 = vadd.xlane.f32.xlu0 %v1180
        %v1182 = vpop.xlane.xlu0 %1181
        %v1183 = vsel %vm482, %v1155, 0.0
        %1184 = vadd.xlane.f32.xlu0 %v1183
        %v1185 = vpop.xlane.xlu0 %1184
        %v1186 = vsel %vm482, %v1156, 0.0
        %1187 = vadd.xlane.f32.xlu0 %v1186
        %v1188 = vpop.xlane.xlu0 %1187
        %v1189 = vsel %vm482, %v1157, 0.0
        %1190 = vadd.xlane.f32.xlu0 %v1189
        %v1191 = vpop.xlane.xlu0 %1190
        %v1192 = vsel %vm482, %v1158, 0.0
        %1193 = vadd.xlane.f32.xlu0 %v1192
        %v1194 = vpop.xlane.xlu0 %1193
        %v1195 = vsel %vm482, %v1159, 0.0
        %1196 = vadd.xlane.f32.xlu0 %v1195
        %v1197 = vpop.xlane.xlu0 %1196
        %v1198 = vsel %vm482, %v1160, 0.0
        %1199 = vadd.xlane.f32.xlu0 %v1198
        %v1200 = vpop.xlane.xlu0 %1199
        %v1201 = vsel %vm482, %v1161, 0.0
        %1202 = vadd.xlane.f32.xlu0 %v1201
        %v1203 = vpop.xlane.xlu0 %1202
        %v1204 = vsel %vm482, %v1162, 0.0
        %1205 = vadd.xlane.f32.xlu0 %v1204
        %v1206 = vpop.xlane.xlu0 %1205
        %v1207 = vsel %vm482, %v1163, 0.0
        %1208 = vadd.xlane.f32.xlu0 %v1207
        %v1209 = vpop.xlane.xlu0 %1208
        %v1210 = vsel %vm482, %v1164, 0.0
        %1211 = vadd.xlane.f32.xlu0 %v1210
        %v1212 = vpop.xlane.xlu0 %1211
        %v1213 = vmax.f32 %v1167, %v1179
        %v1214 = vmax.f32 %v1173, %v1185
        %v1215 = vmax.f32 %v1213, %v1191
        %v1216 = vmax.f32 %v1214, %v1197
        %v1217 = vmax.f32 %v1215, %v1203
        %v1218 = vmax.f32 %v1216, %v1209
        %v1219 = vmax.f32 %v1217, %v1218
        %v1220 = vmax.f32 %v1170, %v1182
        %v1221 = vmax.f32 %v1176, %v1188
        %v1222 = vmax.f32 %v1220, %v1194
        %v1223 = vmax.f32 %v1221, %v1200
        %v1224 = vmax.f32 %v1222, %v1206
        %v1225 = vmax.f32 %v1223, %v1212
        %v1226 = vmax.f32 %v1224, %v1225
        %v1227 = vsub.f32 %v1167, %v1219
        %v1228 = vsub.f32 %v1170, %v1226
        %v1229 = vsub.f32 %v1173, %v1219
        %v1230 = vsub.f32 %v1176, %v1226
        %v1231 = vsub.f32 %v1179, %v1219
        %v1232 = vsub.f32 %v1182, %v1226
        %v1233 = vsub.f32 %v1185, %v1219
        %v1234 = vsub.f32 %v1188, %v1226
        %v1235 = vsub.f32 %v1191, %v1219
        %v1236 = vsub.f32 %v1194, %v1226
        %v1237 = vsub.f32 %v1197, %v1219
        %v1238 = vsub.f32 %v1200, %v1226
        %v1239 = vsub.f32 %v1203, %v1219
        %v1240 = vsub.f32 %v1206, %v1226
        %v1241 = vsub.f32 %v1209, %v1219
        %v1242 = vsub.f32 %v1212, %v1226
        %v1243 = vmul.f32 %v1227, 1.442695
        %v1244 = vpow.pop %v1243
        %v1245 = vmul.f32 %v1228, 1.442695
        %v1246 = vpow.pop %v1245
        %v1247 = vmul.f32 %v1229, 1.442695
        %v1248 = vpow.pop %v1247
        %v1249 = vmul.f32 %v1230, 1.442695
        %v1250 = vpow.pop %v1249
        %v1251 = vmul.f32 %v1231, 1.442695
        %v1252 = vpow.pop %v1251
        %v1253 = vmul.f32 %v1232, 1.442695
        %v1254 = vpow.pop %v1253
        %v1255 = vmul.f32 %v1233, 1.442695
        %v1256 = vpow.pop %v1255
        %v1257 = vmul.f32 %v1234, 1.442695
        %v1258 = vpow.pop %v1257
        %v1259 = vmul.f32 %v1235, 1.442695
        %v1260 = vpow.pop %v1259
        %v1261 = vmul.f32 %v1236, 1.442695
        %v1262 = vpow.pop %v1261
        %v1263 = vmul.f32 %v1237, 1.442695
        %v1264 = vpow.pop %v1263
        %v1265 = vmul.f32 %v1238, 1.442695
        %v1266 = vpow.pop %v1265
        %v1267 = vmul.f32 %v1239, 1.442695
        %v1268 = vpow.pop %v1267
        %v1269 = vmul.f32 %v1240, 1.442695
        %v1270 = vpow.pop %v1269
        %v1271 = vmul.f32 %v1241, 1.442695
        %v1272 = vpow.pop %v1271
        %v1273 = vmul.f32 %v1242, 1.442695
        %v1274 = vpow.pop %v1273
        %v1275 = vadd.f32 %v1244, %v1248
        %v1276 = vadd.f32 %v1275, %v1252
        %v1277 = vadd.f32 %v1276, %v1256
        %v1278 = vadd.f32 %v1277, %v1260
        %v1279 = vadd.f32 %v1278, %v1264
        %v1280 = vadd.f32 %v1279, %v1268
        %v1281 = vadd.f32 %v1280, %v1272
        %v1282 = vadd.f32 %v1246, %v1250
        %v1283 = vadd.f32 %v1282, %v1254
        %v1284 = vadd.f32 %v1283, %v1258
        %v1285 = vadd.f32 %v1284, %v1262
        %v1286 = vadd.f32 %v1285, %v1266
        %v1287 = vadd.f32 %v1286, %v1270
        %v1288 = vadd.f32 %v1287, %v1274
        %v1289 = vrcp.pop %v1281
        %v1290 = vrcp.pop %v1288
        %v1291 = vmul.f32 %v1244, %v1289
        %v1292 = vmul.f32 %v1246, %v1290
        %v1293 = vmul.f32 %v1248, %v1289
        %v1294 = vmul.f32 %v1250, %v1290
        %v1295 = vmul.f32 %v1252, %v1289
        %v1296 = vmul.f32 %v1254, %v1290
        %v1297 = vmul.f32 %v1256, %v1289
        %v1298 = vmul.f32 %v1258, %v1290
        %v1299 = vmul.f32 %v1260, %v1289
        %v1300 = vmul.f32 %v1262, %v1290
        %v1301 = vmul.f32 %v1264, %v1289
        %v1302 = vmul.f32 %v1266, %v1290
        %v1303 = vmul.f32 %v1268, %v1289
        %v1304 = vmul.f32 %v1270, %v1290
        %v1305 = vmul.f32 %v1272, %v1289
        %v1306 = vmul.f32 %v1274, %v1290
        %v1307 = vmul.f32 %v1291, %v998
        %v1308 = vmul.f32 %v1292, %v999
        %v1309 = vmul.f32 %v1293, %v1000
        %v1310 = vmul.f32 %v1294, %v1001
        %v1311 = vmul.f32 %v1295, %v1002
        %v1312 = vmul.f32 %v1296, %v1003
        %v1313 = vmul.f32 %v1297, %v1004
        %v1314 = vmul.f32 %v1298, %v1005
        %v1315 = vmul.f32 %v1299, %v1006
        %v1316 = vmul.f32 %v1300, %v1007
        %v1317 = vmul.f32 %v1301, %v1008
        %v1318 = vmul.f32 %v1302, %v1009
        %v1319 = vmul.f32 %v1303, %v1010
        %v1320 = vmul.f32 %v1304, %v1011
        %v1321 = vmul.f32 %v1305, %v1012
        %v1322 = vmul.f32 %v1306, %v1013
        %v1323 = vsel %vm482, %v1307, 0.0
        %v1324 = vsel %vm482, %v1309, 0.0
        %v1325 = vadd.f32 %v1323, %v1324
        %v1326 = vsel %vm482, %v1311, 0.0
        %v1327 = vadd.f32 %v1325, %v1326
        %v1328 = vsel %vm482, %v1313, 0.0
        %v1329 = vadd.f32 %v1327, %v1328
        %v1330 = vsel %vm482, %v1315, 0.0
        %v1331 = vadd.f32 %v1329, %v1330
        %v1332 = vsel %vm482, %v1317, 0.0
        %v1333 = vadd.f32 %v1331, %v1332
        %v1334 = vsel %vm482, %v1319, 0.0
        %v1335 = vadd.f32 %v1333, %v1334
        %v1336 = vsel %vm482, %v1321, 0.0
        %v1337 = vadd.f32 %v1335, %v1336
        %v1338 = vsel %vm482, %v1308, 0.0
        %v1339 = vsel %vm482, %v1310, 0.0
        %v1340 = vadd.f32 %v1338, %v1339
        %v1341 = vsel %vm482, %v1312, 0.0
        %v1342 = vadd.f32 %v1340, %v1341
        %v1343 = vsel %vm482, %v1314, 0.0
        %v1344 = vadd.f32 %v1342, %v1343
        %v1345 = vsel %vm482, %v1316, 0.0
        %v1346 = vadd.f32 %v1344, %v1345
        %v1347 = vsel %vm482, %v1318, 0.0
        %v1348 = vadd.f32 %v1346, %v1347
        %v1349 = vsel %vm482, %v1320, 0.0
        %v1350 = vadd.f32 %v1348, %v1349
        %v1351 = vsel %vm482, %v1322, 0.0
        %v1352 = vadd.f32 %v1350, %v1351
        %1353 = vst.msk [vmem:[%s456] sm:$0xff] %vm482, %v1337
        %1354 = vst.msk [vmem:[%s456 + $0x8] sm:$0xff] %vm482, %v1352
        %s1355 = smul.u32 2, %s21
        %p1356 = scmp.lt.s32.totalorder %s1355, 3
        %s1357 = scalar_select %p1356, %s1355, 3
        %s1358 = smul.addr %s1357, 8
        %s1359 = scalar_lea.vmem %s10, %s1358
        // Predicated region
        $region106: #{hier_att_net.2} parent=93 // pred_check
          %p1360 = pneg %p254
        $region107: #{hier_att_net.2} parent=93 // pred_check_branch
          %1362 = sbr.rel (%p1360) target = $region109
        $region108: #{hier_att_net.2} parent=93 // pred_region
          %s1363 = smul.u32 2, %s21
        $region109: #{hier_att_net.2} parent=93 // pred_fallthru
          _
      $region94: #{hier_att_net.2} parent=5 // pred_fallthru
        _
      %p1364 = scmp.le.s32.totalorder 2, %s16
      // Predicated region
      $region110: #{hier_att_net.2} parent=5 // pred_check
        %p1365 = pneg %p1364
      $region111: #{hier_att_net.2} parent=5 // pred_check_branch
        %1367 = sbr.rel (%p1365) target = $region113
      $region112: #{hier_att_net.2} parent=5 // pred_region
        %s1368 = ssub.s32 %s16, 2
        // Predicated region
        $region114: #{hier_att_net.2} parent=112 // pred_check
          %p1369 = pneg %p260
        $region115: #{hier_att_net.2} parent=112 // pred_check_branch
          %1371 = sbr.rel (%p1369) target = $region117
        $region116: #{hier_att_net.2} parent=112 // pred_region
          %s1372 = smul.u32 2, %s22
          %p1373 = scmp.lt.s32.totalorder %s1372, 3
          %s1374 = scalar_select %p1373, %s1372, 3
          %s1375 = smul.addr %s1374, 8
          %s1376 = scalar_lea.vmem %s10, %s1375
        $region117: #{hier_att_net.2} parent=112 // pred_fallthru
          _
      $region113: #{hier_att_net.2} parent=5 // pred_fallthru
        _
    $region6: #{hier_att_net.2} parent=1 // loop_footer
      %s20 = sadd.s32 1, %s16
    $region7: #{hier_att_net.2} parent=1 // loop_footer_branch
      %15 = sbr.rel target = $region3
    $region8: #{hier_att_net.2} parent=1 // loop_exit
      _

</llo_original>
